<compile_context>
chip_gen: v6e
topology: v6e:2x2x1
jax: 0.10.0
libtpu: 0.0.40
codegen_flags: <defaults>
</compile_context>

<pallas_src>
import functools

import jax
import jax.numpy as jnp
from jax import lax
from jax.experimental import pallas as pl
from jax.experimental.pallas import tpu as pltpu


def _second_difference_matrix(n):
    """(n, n) tridiagonal [1, -2, 1] matrix (zero-padded 1-D Laplacian)."""
    r = lax.broadcasted_iota(jnp.int32, (n, n), 0)
    c = lax.broadcasted_iota(jnp.int32, (n, n), 1)
    diff = r - c
    return jnp.where(diff == 0, -2.0,
                     jnp.where(jnp.abs(diff) == 1, 1.0, 0.0)).astype(jnp.float32)


def _laplacian_l1_kernel(sr_ref, hr_ref, out_ref):
    """sr_ref / hr_ref: (nb, H, W) channel-1 tiles. out_ref: (1, W) lane sums."""
    # Cast after load so the DMA moves the native (possibly bf16) dtype.
    d = sr_ref[...].astype(jnp.float32) - hr_ref[...].astype(jnp.float32)
    nb, h, w = d.shape

    t_h = _second_difference_matrix(h)  # vertical neighbours   (rows)
    t_w = _second_difference_matrix(w)  # horizontal neighbours (columns)

    lane_sums = jnp.zeros((1, w), jnp.float32)
    # nb is a small static block size; the loop unrolls into nb pairs of tiny
    # MXU matmuls while the DMA cost is amortised over the whole block.
    for i in range(nb):
        d_i = d[i]  # (H, W)
        lap = (jnp.dot(t_h, d_i, precision=lax.Precision.HIGHEST,
                       preferred_element_type=jnp.float32) +
               jnp.dot(d_i, t_w, precision=lax.Precision.HIGHEST,
                       preferred_element_type=jnp.float32))
        # Reduce rows (sublane) only; keep the lane axis. The single cross-lane
        # reduce over the (G, 1, W) partials happens once, in the wrapper.
        lane_sums = lane_sums + jnp.sum(jnp.abs(lap), axis=0, keepdims=True)

    out_ref[...] = lane_sums


def _pick_batch_block(n, h, w, itemsize,
                      max_images_per_block=8, vmem_budget_bytes=24 << 20):
    """Largest divisor of n whose double-buffered input working set fits VMEM."""
    per_image = h * w * itemsize
    nb = max(1, min(max_images_per_block,
                    vmem_budget_bytes // (4 * per_image)))  # 2 inputs x 2 bufs
    nb = min(n, nb)
    while n % nb:
        nb -= 1
    return nb


@functools.partial(jax.jit, static_argnames=("block_n",))
def laplacian_loss(sr, hr, block_n=None):
    """Pallas implementation of LaplacianLoss.forward (NCHW inputs)."""
    n, c, h, w = sr.shape
    assert hr.shape == sr.shape and c >= 2

    itemsize = jnp.dtype(sr.dtype).itemsize
    nb = block_n if block_n is not None else _pick_batch_block(n, h, w, itemsize)
    assert n % nb == 0, (n, nb)
    g = n // nb

    partials = pl.pallas_call(
        _laplacian_l1_kernel,
        out_shape=jax.ShapeDtypeStruct((g, 1, w), jnp.float32),
        grid_spec=pltpu.PrefetchScalarGridSpec(
            num_scalar_prefetch=0,
            grid=(g,),
            in_specs=[
                # Channel 1 selected here (squeezed C dim, block index 1);
                # no wrapper-side slice / pad / cast, no extra HBM pass.
                pl.BlockSpec((nb, None, h, w), lambda i: (i, 1, 0, 0)),
                pl.BlockSpec((nb, None, h, w), lambda i: (i, 1, 0, 0)),
            ],
            out_specs=pl.BlockSpec((None, 1, w), lambda i: (i, 0, 0)),
        ),
        compiler_params=pltpu.CompilerParams(
            # Independent per-block partial sums -> the batch axis is parallel
            # (lets v7x shard the grid across both TensorCores).
            dimension_semantics=("parallel",),
            vmem_limit_bytes=32 * 1024 * 1024,
        ),
    )(sr, hr)

    # F.l1_loss reduction='mean' over all N*1*H*W gradient-map elements.
    return jnp.sum(partials) / (n * h * w)


def _reference_loss(sr, hr):
    """Pure-JAX reference (lax conv, NCHW) for validation."""
    k = jnp.array([[0.0, 1.0, 0.0],
                   [1.0, -4.0, 1.0],
                   [0.0, 1.0, 0.0]], jnp.float32).reshape(1, 1, 3, 3)
    sr1 = sr[:, 1:2, :, :].astype(jnp.float32)
    hr1 = hr[:, 1:2, :, :].astype(jnp.float32)
    dn = lax.conv_dimension_numbers(sr1.shape, k.shape, ("NCHW", "OIHW", "NCHW"))
    g_sr = lax.conv_general_dilated(sr1, k, (1, 1), ((1, 1), (1, 1)),
                                    dimension_numbers=dn,
                                    precision=lax.Precision.HIGHEST)
    g_hr = lax.conv_general_dilated(hr1, k, (1, 1), ((1, 1), (1, 1)),
                                    dimension_numbers=dn,
                                    precision=lax.Precision.HIGHEST)
    return jnp.mean(jnp.abs(g_sr - g_hr))


if __name__ == "__main__":
    key = jax.random.PRNGKey(0)
    k1, k2, k3, k4 = jax.random.split(key, 4)

    # Whole batch in a single grid step (auto block size).
    sr = jax.random.normal(k1, (2, 4, 16, 16), dtype=jnp.float32)
    hr = jax.random.normal(k2, (2, 4, 16, 16), dtype=jnp.float32)
    loss = jax.block_until_ready(laplacian_loss(sr, hr))
    ref = jax.block_until_ready(_reference_loss(sr, hr))
    assert jnp.allclose(loss, ref, rtol=5e-5, atol=1e-5), (loss, ref)

    # Multi-block "parallel" path + rectangular spatial dims.
    sr2 = jax.random.normal(k3, (4, 4, 16, 24), dtype=jnp.float32)
    hr2 = jax.random.normal(k4, (4, 4, 16, 24), dtype=jnp.float32)
    loss2 = jax.block_until_ready(laplacian_loss(sr2, hr2, block_n=2))
    ref2 = jax.block_until_ready(_reference_loss(sr2, hr2))
    assert jnp.allclose(loss2, ref2, rtol=5e-5, atol=1e-5), (loss2, ref2)

    print("KERNEL_OK")
</pallas_src>

<mosaic_0001>
module attributes {stable_mosaic.version = 11 : i64} {
  func.func @_laplacian_l1_kernel(%arg0: i32, %arg1: memref<2x1x16x16xf32, #tpu.memory_space<vmem>>, %arg2: memref<2x1x16x16xf32, #tpu.memory_space<vmem>>, %arg3: memref<1x1x16xf32, #tpu.memory_space<vmem>>) attributes {dimension_semantics = [#tpu.dimension_semantics<parallel>], iteration_bounds = array<i64: 1>, scalar_prefetch = 0 : i64, scratch_operands = 0 : i64, tpu.core_type = #tpu.core_type<tc>, window_params = [{transform_indices = @transform_0, window_bounds = array<i64: 2, 1, 16, 16>}, {transform_indices = @transform_1, window_bounds = array<i64: 2, 1, 16, 16>}, {transform_indices = @transform_2, window_bounds = array<i64: 1, 1, 16>}]} {
    %c0 = arith.constant 0 : index
    %c0_0 = arith.constant 0 : index
    %c0_1 = arith.constant 0 : index
    %c0_2 = arith.constant 0 : index
    %0 = vector.load %arg1[%c0, %c0_0, %c0_1, %c0_2] : memref<2x1x16x16xf32, #tpu.memory_space<vmem>>, vector<2x1x16x16xf32>
    %1 = vector.shape_cast %0 : vector<2x1x16x16xf32> to vector<2x16x16xf32>
    %c0_3 = arith.constant 0 : index
    %c0_4 = arith.constant 0 : index
    %c0_5 = arith.constant 0 : index
    %c0_6 = arith.constant 0 : index
    %2 = vector.load %arg2[%c0_3, %c0_4, %c0_5, %c0_6] : memref<2x1x16x16xf32, #tpu.memory_space<vmem>>, vector<2x1x16x16xf32>
    %3 = vector.shape_cast %2 : vector<2x1x16x16xf32> to vector<2x16x16xf32>
    %4 = arith.subf %1, %3 : vector<2x16x16xf32>
    %5 = tpu.iota {dimensions = array<i32: 0>} : vector<16x16xi32>
    %6 = tpu.iota {dimensions = array<i32: 1>} : vector<16x16xi32>
    %7 = arith.subi %5, %6 : vector<16x16xi32>
    %c0_i32 = arith.constant 0 : i32
    %8 = vector.broadcast %c0_i32 : i32 to vector<16x16xi32>
    %9 = arith.cmpi eq, %7, %8 : vector<16x16xi32>
    %10 = math.absi %7 : vector<16x16xi32>
    %c1_i32 = arith.constant 1 : i32
    %11 = vector.broadcast %c1_i32 : i32 to vector<16x16xi32>
    %12 = arith.cmpi eq, %10, %11 : vector<16x16xi32>
    %cst = arith.constant 1.000000e+00 : f32
    %cst_7 = arith.constant 0.000000e+00 : f32
    %13 = vector.broadcast %cst : f32 to vector<16x16xf32>
    %14 = vector.broadcast %cst_7 : f32 to vector<16x16xf32>
    %15 = arith.select %12, %13, %14 : vector<16x16xi1>, vector<16x16xf32>
    %cst_8 = arith.constant -2.000000e+00 : f32
    %16 = vector.broadcast %cst_8 : f32 to vector<16x16xf32>
    %17 = arith.select %9, %16, %15 : vector<16x16xi1>, vector<16x16xf32>
    %18 = tpu.iota {dimensions = array<i32: 0>} : vector<16x16xi32>
    %19 = tpu.iota {dimensions = array<i32: 1>} : vector<16x16xi32>
    %20 = arith.subi %18, %19 : vector<16x16xi32>
    %c0_i32_9 = arith.constant 0 : i32
    %21 = vector.broadcast %c0_i32_9 : i32 to vector<16x16xi32>
    %22 = arith.cmpi eq, %20, %21 : vector<16x16xi32>
    %23 = math.absi %20 : vector<16x16xi32>
    %c1_i32_10 = arith.constant 1 : i32
    %24 = vector.broadcast %c1_i32_10 : i32 to vector<16x16xi32>
    %25 = arith.cmpi eq, %23, %24 : vector<16x16xi32>
    %cst_11 = arith.constant 1.000000e+00 : f32
    %cst_12 = arith.constant 0.000000e+00 : f32
    %26 = vector.broadcast %cst_11 : f32 to vector<16x16xf32>
    %27 = vector.broadcast %cst_12 : f32 to vector<16x16xf32>
    %28 = arith.select %25, %26, %27 : vector<16x16xi1>, vector<16x16xf32>
    %cst_13 = arith.constant -2.000000e+00 : f32
    %29 = vector.broadcast %cst_13 : f32 to vector<16x16xf32>
    %30 = arith.select %22, %29, %28 : vector<16x16xi1>, vector<16x16xf32>
    %cst_14 = arith.constant 0.000000e+00 : f32
    %31 = vector.broadcast %cst_14 : f32 to vector<1x16xf32>
    %32 = vector.extract_strided_slice %4 {offsets = [0, 0, 0], sizes = [1, 16, 16], strides = [1, 1, 1]} : vector<2x16x16xf32> to vector<1x16x16xf32>
    %33 = vector.shape_cast %32 : vector<1x16x16xf32> to vector<16x16xf32>
    %cst_15 = arith.constant dense<0.000000e+00> : vector<16x16xf32>
    %34 = tpu.matmul %17, %33, %cst_15 {dimension_numbers = #tpu.dot_dimension_numbers<[1], [0], [0], [1], [0, 0, 1, 1], [], []>, precision = #tpu.contract_precision<fp32>} : vector<16x16xf32>, vector<16x16xf32>, vector<16x16xf32> -> vector<16x16xf32>
    %cst_16 = arith.constant dense<0.000000e+00> : vector<16x16xf32>
    %35 = tpu.matmul %33, %30, %cst_16 {dimension_numbers = #tpu.dot_dimension_numbers<[1], [0], [0], [1], [0, 0, 1, 1], [], []>, precision = #tpu.contract_precision<fp32>} : vector<16x16xf32>, vector<16x16xf32>, vector<16x16xf32> -> vector<16x16xf32>
    %36 = arith.addf %34, %35 : vector<16x16xf32>
    %37 = math.absf %36 : vector<16x16xf32>
    %cst_17 = arith.constant dense<0.000000e+00> : vector<16xf32>
    %38 = vector.multi_reduction <add>, %37, %cst_17 [0] : vector<16x16xf32> to vector<16xf32>
    %39 = vector.shape_cast %38 : vector<16xf32> to vector<1x16xf32>
    %40 = arith.addf %31, %39 : vector<1x16xf32>
    %41 = vector.extract_strided_slice %4 {offsets = [1, 0, 0], sizes = [1, 16, 16], strides = [1, 1, 1]} : vector<2x16x16xf32> to vector<1x16x16xf32>
    %42 = vector.shape_cast %41 : vector<1x16x16xf32> to vector<16x16xf32>
    %cst_18 = arith.constant dense<0.000000e+00> : vector<16x16xf32>
    %43 = tpu.matmul %17, %42, %cst_18 {dimension_numbers = #tpu.dot_dimension_numbers<[1], [0], [0], [1], [0, 0, 1, 1], [], []>, precision = #tpu.contract_precision<fp32>} : vector<16x16xf32>, vector<16x16xf32>, vector<16x16xf32> -> vector<16x16xf32>
    %cst_19 = arith.constant dense<0.000000e+00> : vector<16x16xf32>
    %44 = tpu.matmul %42, %30, %cst_19 {dimension_numbers = #tpu.dot_dimension_numbers<[1], [0], [0], [1], [0, 0, 1, 1], [], []>, precision = #tpu.contract_precision<fp32>} : vector<16x16xf32>, vector<16x16xf32>, vector<16x16xf32> -> vector<16x16xf32>
    %45 = arith.addf %43, %44 : vector<16x16xf32>
    %46 = math.absf %45 : vector<16x16xf32>
    %cst_20 = arith.constant dense<0.000000e+00> : vector<16xf32>
    %47 = vector.multi_reduction <add>, %46, %cst_20 [0] : vector<16x16xf32> to vector<16xf32>
    %48 = vector.shape_cast %47 : vector<16xf32> to vector<1x16xf32>
    %49 = arith.addf %40, %48 : vector<1x16xf32>
    %c0_21 = arith.constant 0 : index
    %c0_22 = arith.constant 0 : index
    %c0_23 = arith.constant 0 : index
    %50 = vector.load %arg3[%c0_21, %c0_22, %c0_23] : memref<1x1x16xf32, #tpu.memory_space<vmem>>, vector<1x1x16xf32>
    %51 = vector.shape_cast %50 : vector<1x1x16xf32> to vector<1x16xf32>
    %52 = vector.shape_cast %49 : vector<1x16xf32> to vector<1x1x16xf32>
    tpu.vector_store %arg3[%c0_21, %c0_22, %c0_23], %52 {strides = array<i32>} : memref<1x1x16xf32, #tpu.memory_space<vmem>>, vector<1x1x16xf32>,
    return
  }
  func.func @transform_0(%arg0: i32) -> (i32, i32, i32, i32) {
    %c1_i32 = arith.constant 1 : i32
    %c0_i32 = arith.constant 0 : i32
    %c0_i32_0 = arith.constant 0 : i32
    %c0_i32_1 = arith.constant 0 : i32
    return %arg0, %c1_i32, %c0_i32, %c0_i32_0 : i32, i32, i32, i32
  }
  func.func @transform_1(%arg0: i32) -> (i32, i32, i32, i32) {
    %c1_i32 = arith.constant 1 : i32
    %c0_i32 = arith.constant 0 : i32
    %c0_i32_0 = arith.constant 0 : i32
    %c0_i32_1 = arith.constant 0 : i32
    return %arg0, %c1_i32, %c0_i32, %c0_i32_0 : i32, i32, i32, i32
  }
  func.func @transform_2(%arg0: i32) -> (i32, i32, i32) {
    %c0_i32 = arith.constant 0 : i32
    %c0_i32_0 = arith.constant 0 : i32
    %c0_i32_1 = arith.constant 0 : i32
    return %arg0, %c0_i32, %c0_i32_0 : i32, i32, i32
  }
}

</mosaic_0001>

<llo_original>
// kernel: laplacian_loss.1
$region0: #{laplacian_loss.1}
  #allocation0 [shape = 'u32[]', space=smem, size = 0x4, offset = 0x4, fixed_abs, tag = 'smem constant byte address 0x4 - core index']
  #allocation1 [shape = 'u32[144,128]{1,0:T(1,128)}', space=vmem, size = 0x12000, scoped, tag = 'internal scratch']
  #allocation6 [shape = 's32[]', space=sflag, size = 0x4, offset = 0, fixed_abs, tag = 'sflag constant byte address 0x0 - dummy sync flag']
  #allocation8 [shape = 's32[]', space=sflag, size = 0x4, offset = 0, fixed_abs, tag = 'sflag constant byte address 0x0 - dummy sync flag']
  %s0 = inlined_call_operand.hbm [shape: f32[2,4,16,16], index: 0, kind: input, shape index: {}]
  %s1 = inlined_call_operand.hbm [shape: f32[2,4,16,16], index: 1, kind: input, shape index: {}]
  %s2 = inlined_call_operand.vmem [shape: f32[1,1,16], index: 2, kind: output, shape index: {}]
  %s3 = sld [smem:[#allocation0]]
  $region26: #{laplacian_loss.1} parent=0
    _
  %s5 = ssub.s32 1, %s3
  %s6 = scalar_select 0, %s5, %s3
  $region1: #{laplacian_loss.1} parent=0
    #allocation2 [shape = 'u8[16384]{0}', space=vmem, size = 0x4000, scoped, tag = 'input window, operand 0, single buffered']
    #allocation3 [shape = 's32[1]{0}', space=sflag, size = 0x4, scoped, tag = 'scoped memory for laplacian_loss.1']
    #allocation4 [shape = 'u8[16384]{0}', space=vmem, size = 0x4000, scoped, tag = 'input window, operand 1, single buffered']
    #allocation5 [shape = 's32[1]{0}', space=sflag, size = 0x4, scoped, tag = 'scoped memory for laplacian_loss.1']
    %7 = vsyncpa [#allocation3], 0
    %8 = vsyncpa [#allocation5], 0
    // Predicated region
    $region2: #{laplacian_loss.1} parent=1 // pred_check
      _
    $region3: #{laplacian_loss.1} parent=1 // pred_check_branch
      %10 = sbr.rel (0) target = $region5
    $region4: #{laplacian_loss.1} parent=1 // pred_region
      #allocation7 [shape = 'u32[6]{0}', space=smem, size = 0x18, scoped, tag = 'DMA stride descriptor']
      %s12 = ssub.s32 512, 512
      %13 = vsyncadd [#allocation3], %s12
      %s14 = scalar_lea.hbm %s0, 256
      %s16 = sshll.u32 1, 14
      %s17 = sxor.u32 4294967295, %s16
      %s19 = sld [smem:[#allocation0]]
      %s20 = sadd.s32 2, %s19
      %s22 = sshll.u32 7, 26
      %s23 = sxor.u32 4294967295, %s22
      %s24 = sand.u32 0, %s23
      %s25 = sshll.u32 %s20, 26
      %s26 = sor.u32 %s24, %s25
      %s27 = sshll.u32 [#allocation2], 4
      %s28 = int_to_ptr.vmem [resolvable:$true] %s27
      %34 = sst [smem:[#allocation7]] 1024
      %s35 = scalar_lea.smem [#allocation7], 1
      %36 = sst [smem:[%s35]] 256
      %s37 = scalar_lea.smem [#allocation7], 2
      %38 = sst [smem:[%s37]] 2
      %s39 = scalar_lea.smem [#allocation7], 3
      %40 = sst [smem:[%s39]] 128
      %s41 = scalar_lea.smem [#allocation7], 4
      %42 = sst [smem:[%s41]] 128
      %s43 = scalar_lea.smem [#allocation7], 5
      %44 = sst [smem:[%s43]] 8
      %46 = dma.general %s14, 512, %s28, [#allocation3], 131072, [#allocation7], %s26, 0
    $region5: #{laplacian_loss.1} parent=1 // pred_fallthru
      _
    // Predicated region
    $region6: #{laplacian_loss.1} parent=1 // pred_check
      _
    $region7: #{laplacian_loss.1} parent=1 // pred_check_branch
      %48 = sbr.rel (0) target = $region9
    $region8: #{laplacian_loss.1} parent=1 // pred_region
      #allocation9 [shape = 'u32[6]{0}', space=smem, size = 0x18, scoped, tag = 'DMA stride descriptor']
      %s50 = ssub.s32 512, 512
      %51 = vsyncadd [#allocation5], %s50
      %s52 = scalar_lea.hbm %s1, 256
      %s54 = sshll.u32 1, 14
      %s55 = sxor.u32 4294967295, %s54
      %s57 = sld [smem:[#allocation0]]
      %s58 = sadd.s32 2, %s57
      %s60 = sshll.u32 7, 26
      %s61 = sxor.u32 4294967295, %s60
      %s62 = sand.u32 0, %s61
      %s63 = sshll.u32 %s58, 26
      %s64 = sor.u32 %s62, %s63
      %s65 = sshll.u32 [#allocation4], 4
      %s66 = int_to_ptr.vmem [resolvable:$true] %s65
      %72 = sst [smem:[#allocation9]] 1024
      %s73 = scalar_lea.smem [#allocation9], 1
      %74 = sst [smem:[%s73]] 256
      %s75 = scalar_lea.smem [#allocation9], 2
      %76 = sst [smem:[%s75]] 2
      %s77 = scalar_lea.smem [#allocation9], 3
      %78 = sst [smem:[%s77]] 128
      %s79 = scalar_lea.smem [#allocation9], 4
      %80 = sst [smem:[%s79]] 128
      %s81 = scalar_lea.smem [#allocation9], 5
      %82 = sst [smem:[%s81]] 8
      %84 = dma.general %s52, 512, %s66, [#allocation5], 131072, [#allocation9], %s64, 0
    $region9: #{laplacian_loss.1} parent=1 // pred_fallthru
      _
    // Predicated region
    $region10: #{laplacian_loss.1} parent=1 // pred_check
      _
    $region11: #{laplacian_loss.1} parent=1 // pred_check_branch
      %86 = sbr.rel (0) target = $region13
    $region12: #{laplacian_loss.1} parent=1 // pred_region
      %87 = dma.done [#allocation3], 512
    $region13: #{laplacian_loss.1} parent=1 // pred_fallthru
      _
    // Predicated region
    $region14: #{laplacian_loss.1} parent=1 // pred_check
      _
    $region15: #{laplacian_loss.1} parent=1 // pred_check_branch
      %89 = sbr.rel (0) target = $region17
    $region16: #{laplacian_loss.1} parent=1 // pred_region
      %90 = dma.done [#allocation5], 512
    $region17: #{laplacian_loss.1} parent=1 // pred_fallthru
      _
    %v91 = vld [vmem:[#allocation2] sm:$0xff]
    %v92 = vld [vmem:[#allocation2 + $0x8] sm:$0xff]
    %v93 = vld [vmem:[#allocation2 + $0x10] sm:$0xff]
    %v94 = vld [vmem:[#allocation2 + $0x18] sm:$0xff]
    %v95 = vld [vmem:[#allocation4] sm:$0xff]
    %v96 = vld [vmem:[#allocation4 + $0x8] sm:$0xff]
    %v97 = vld [vmem:[#allocation4 + $0x10] sm:$0xff]
    %v98 = vld [vmem:[#allocation4 + $0x18] sm:$0xff]
    %v99 = vsub.f32 %v91, %v95
    %v100 = vsub.f32 %v92, %v96
    %v101 = vsub.f32 %v93, %v97
    %v102 = vsub.f32 %v94, %v98
    %v103 = vlaneseq
    %v104 = vshrl.u32 %v103, 7
    %v105 = vadd.s32 %v104, 8
    %v106 = vlaneseq
    %v107 = vand.u32 %v106, 127
    %v108 = vsub.s32 %v104, %v107
    %v109 = vsub.s32 %v105, %v107
    %vm110 = vcmp.eq.s32.totalorder %v108, 0
    %vm111 = vcmp.eq.s32.totalorder %v109, 0
    %vm112 = vcmp.lt.s32.totalorder %v108, 0
    %v113 = vsub.s32 0, %v108
    %v114 = vsel %vm112, %v113, %v108
    %vm115 = vcmp.lt.s32.totalorder %v109, 0
    %v116 = vsub.s32 0, %v109
    %v117 = vsel %vm115, %v116, %v109
    %vm118 = vcmp.eq.s32.totalorder %v114, 1
    %vm119 = vcmp.eq.s32.totalorder %v117, 1
    %v120 = vsel %vm118, 1.0, 0.0
    %v121 = vsel %vm119, 1.0, 0.0
    %v122 = vsel %vm110, -2.0, %v120
    %v123 = vsel %vm111, -2.0, %v121
    %vm124 = vcmask 130048
    %v126 = vsel %vm124, %v99, 0
    %v129 = vsel %vm124, %v100, 0
    %131 = vmatprep.subr.mxu0 0.0
    %132 = vmatpush1.msra.mxu0 0.0
    %133 = vmatprep.subr.mxu0 0.0
    %134 = vmatpush1.msra.mxu0 0.0
    %135 = vmatprep.subr.mxu0 0.0
    %136 = vmatpush1.msra.mxu0 0.0
    %137 = vmatprep.subr.mxu0 0.0
    %138 = vmatpush1.msra.mxu0 0.0
    %139 = vmatprep.subr.mxu0 0.0
    %140 = vmatpush1.msra.mxu0 0.0
    %141 = vmatprep.subr.mxu0 0.0
    %142 = vmatpush1.msra.mxu0 0.0
    %143 = vmatprep.subr.mxu0 0.0
    %144 = vmatpush1.msra.mxu0 0.0
    %145 = vmatprep.subr.mxu0 0.0
    %146 = vmatpush1.msra.mxu0 0.0
    %147 = vmatprep.subr.mxu0 0.0
    %148 = vmatpush1.msra.mxu0 0.0
    %149 = vmatprep.subr.mxu0 0.0
    %150 = vmatpush1.msra.mxu0 0.0
    %151 = vmatprep.subr.mxu0 0.0
    %152 = vmatpush1.msra.mxu0 0.0
    %153 = vmatprep.subr.mxu0 0.0
    %154 = vmatpush1.msra.mxu0 0.0
    %155 = vmatprep.subr.mxu0 0.0
    %156 = vmatpush1.msra.mxu0 0.0
    %157 = vmatprep.subr.mxu0 0.0
    %158 = vmatpush1.msra.mxu0 0.0
    %159 = vmatprep.subr.mxu0 0.0
    %160 = vmatpush1.msra.mxu0 %v123
    %161 = vmatprep.subr.mxu0 0.0
    %162 = vmatpush1.msra.mxu0 %v122
    %163 = vmatprep.subr.mxu0 0.0
    %164 = vmatpush2.msra.mxu0 0.0
    %165 = vmatprep.subr.mxu0 0.0
    %166 = vmatpush2.msra.mxu0 0.0
    %167 = vmatprep.subr.mxu0 0.0
    %168 = vmatpush2.msra.mxu0 0.0
    %169 = vmatprep.subr.mxu0 0.0
    %170 = vmatpush2.msra.mxu0 0.0
    %171 = vmatprep.subr.mxu0 0.0
    %172 = vmatpush2.msra.mxu0 0.0
    %173 = vmatprep.subr.mxu0 0.0
    %174 = vmatpush2.msra.mxu0 0.0
    %175 = vmatprep.subr.mxu0 0.0
    %176 = vmatpush2.msra.mxu0 0.0
    %177 = vmatprep.subr.mxu0 0.0
    %178 = vmatpush2.msra.mxu0 0.0
    %179 = vmatprep.subr.mxu0 0.0
    %180 = vmatpush2.msra.mxu0 0.0
    %181 = vmatprep.subr.mxu0 0.0
    %182 = vmatpush2.msra.mxu0 0.0
    %183 = vmatprep.subr.mxu0 0.0
    %184 = vmatpush2.msra.mxu0 0.0
    %185 = vmatprep.subr.mxu0 0.0
    %186 = vmatpush2.msra.mxu0 0.0
    %187 = vmatprep.subr.mxu0 0.0
    %188 = vmatpush2.msra.mxu0 0.0
    %189 = vmatprep.subr.mxu0 0.0
    %190 = vmatpush2.msra.mxu0 0.0
    %191 = vmatprep.subr.mxu0 0.0
    %192 = vmatpush2.msra.mxu0 0.0
    %193 = vmatprep.subr.mxu0 0.0
    %194 = vmatpush2.msra.mxu0 0.0
    %195 = vmatprep.mubr.f32.mxu0 0.0
    %v196 = vand.u32 %v126, 4294901760
    %v197 = vsub.f32 %v126, %v196
    %v198 = vand.u32 %v197, 4294901760
    %v199 = vsub.f32 %v197, %v198
    %v200 = vand.u32 %v199, 4294901760
    %201 = vmatmul.mubr.f32.gmra.mxu0 %v200
    %v202 = vpop.f32.mrf.mxu0
    %v203 = vadd.f32 0.0, %v202
    %v204 = vpop.f32.mrf.mxu0
    %205 = vmatprep.mubr.f32.mxu0 0.0
    %v206 = vand.u32 %v129, 4294901760
    %v207 = vsub.f32 %v129, %v206
    %v208 = vand.u32 %v207, 4294901760
    %v209 = vsub.f32 %v207, %v208
    %v210 = vand.u32 %v209, 4294901760
    %211 = vmatmul.mubr.f32.gmra.mxu0 %v210
    %v212 = vpop.f32.mrf.mxu0
    %v213 = vadd.f32 0.0, %v212
    %v214 = vpop.f32.mrf.mxu0
    %215 = vdwg.mxu0
    %216 = vmatprep.subr.mxu0 0.0
    %217 = vmatpush1.msra.mxu0 0.0
    %218 = vmatprep.subr.mxu0 0.0
    %219 = vmatpush1.msra.mxu0 0.0
    %220 = vmatprep.subr.mxu0 0.0
    %221 = vmatpush1.msra.mxu0 0.0
    %222 = vmatprep.subr.mxu0 0.0
    %223 = vmatpush1.msra.mxu0 0.0
    %224 = vmatprep.subr.mxu0 0.0
    %225 = vmatpush1.msra.mxu0 0.0
    %226 = vmatprep.subr.mxu0 0.0
    %227 = vmatpush1.msra.mxu0 0.0
    %228 = vmatprep.subr.mxu0 0.0
    %229 = vmatpush1.msra.mxu0 0.0
    %230 = vmatprep.subr.mxu0 0.0
    %231 = vmatpush1.msra.mxu0 0.0
    %232 = vmatprep.subr.mxu0 0.0
    %233 = vmatpush1.msra.mxu0 0.0
    %234 = vmatprep.subr.mxu0 0.0
    %235 = vmatpush1.msra.mxu0 0.0
    %236 = vmatprep.subr.mxu0 0.0
    %237 = vmatpush1.msra.mxu0 0.0
    %238 = vmatprep.subr.mxu0 0.0
    %239 = vmatpush1.msra.mxu0 0.0
    %240 = vmatprep.subr.mxu0 0.0
    %241 = vmatpush1.msra.mxu0 0.0
    %242 = vmatprep.subr.mxu0 0.0
    %243 = vmatpush1.msra.mxu0 0.0
    %244 = vmatprep.subr.mxu0 0.0
    %v245 = vsub.f32 %v123, %v123
    %v246 = vand.u32 %v245, 4294901760
    %v247 = vsub.f32 %v245, %v246
    %v248 = vand.u32 %v247, 4294901760
    %249 = vmatpush1.msra.mxu0 %v248
    %250 = vmatprep.subr.mxu0 0.0
    %v251 = vsub.f32 %v122, %v122
    %v252 = vand.u32 %v251, 4294901760
    %v253 = vsub.f32 %v251, %v252
    %v254 = vand.u32 %v253, 4294901760
    %255 = vmatpush1.msra.mxu0 %v254
    %256 = vmatprep.subr.mxu0 0.0
    %257 = vmatpush2.msra.mxu0 0.0
    %258 = vmatprep.subr.mxu0 0.0
    %259 = vmatpush2.msra.mxu0 0.0
    %260 = vmatprep.subr.mxu0 0.0
    %261 = vmatpush2.msra.mxu0 0.0
    %262 = vmatprep.subr.mxu0 0.0
    %263 = vmatpush2.msra.mxu0 0.0
    %264 = vmatprep.subr.mxu0 0.0
    %265 = vmatpush2.msra.mxu0 0.0
    %266 = vmatprep.subr.mxu0 0.0
    %267 = vmatpush2.msra.mxu0 0.0
    %268 = vmatprep.subr.mxu0 0.0
    %269 = vmatpush2.msra.mxu0 0.0
    %270 = vmatprep.subr.mxu0 0.0
    %271 = vmatpush2.msra.mxu0 0.0
    %272 = vmatprep.subr.mxu0 0.0
    %273 = vmatpush2.msra.mxu0 0.0
    %274 = vmatprep.subr.mxu0 0.0
    %275 = vmatpush2.msra.mxu0 0.0
    %276 = vmatprep.subr.mxu0 0.0
    %277 = vmatpush2.msra.mxu0 0.0
    %278 = vmatprep.subr.mxu0 0.0
    %279 = vmatpush2.msra.mxu0 0.0
    %280 = vmatprep.subr.mxu0 0.0
    %281 = vmatpush2.msra.mxu0 0.0
    %282 = vmatprep.subr.mxu0 0.0
    %283 = vmatpush2.msra.mxu0 0.0
    %284 = vmatprep.subr.mxu0 0.0
    %285 = vmatpush2.msra.mxu0 0.0
    %286 = vmatprep.subr.mxu0 0.0
    %287 = vmatpush2.msra.mxu0 0.0
    %288 = vmatprep.mubr.f32.mxu0 0.0
    %v289 = vand.u32 %v126, 4294901760
    %290 = vmatmul.mubr.f32.gmra.mxu0 %v289
    %v291 = vpop.f32.mrf.mxu0
    %v292 = vadd.f32 %v203, %v291
    %v293 = vpop.f32.mrf.mxu0
    %294 = vmatprep.mubr.f32.mxu0 0.0
    %v295 = vand.u32 %v129, 4294901760
    %296 = vmatmul.mubr.f32.gmra.mxu0 %v295
    %v297 = vpop.f32.mrf.mxu0
    %v298 = vadd.f32 %v213, %v297
    %v299 = vpop.f32.mrf.mxu0
    %300 = vdwg.mxu0
    %301 = vmatprep.subr.mxu0 0.0
    %302 = vmatpush1.msra.mxu0 0.0
    %303 = vmatprep.subr.mxu0 0.0
    %304 = vmatpush1.msra.mxu0 0.0
    %305 = vmatprep.subr.mxu0 0.0
    %306 = vmatpush1.msra.mxu0 0.0
    %307 = vmatprep.subr.mxu0 0.0
    %308 = vmatpush1.msra.mxu0 0.0
    %309 = vmatprep.subr.mxu0 0.0
    %310 = vmatpush1.msra.mxu0 0.0
    %311 = vmatprep.subr.mxu0 0.0
    %312 = vmatpush1.msra.mxu0 0.0
    %313 = vmatprep.subr.mxu0 0.0
    %314 = vmatpush1.msra.mxu0 0.0
    %315 = vmatprep.subr.mxu0 0.0
    %316 = vmatpush1.msra.mxu0 0.0
    %317 = vmatprep.subr.mxu0 0.0
    %318 = vmatpush1.msra.mxu0 0.0
    %319 = vmatprep.subr.mxu0 0.0
    %320 = vmatpush1.msra.mxu0 0.0
    %321 = vmatprep.subr.mxu0 0.0
    %322 = vmatpush1.msra.mxu0 0.0
    %323 = vmatprep.subr.mxu0 0.0
    %324 = vmatpush1.msra.mxu0 0.0
    %325 = vmatprep.subr.mxu0 0.0
    %326 = vmatpush1.msra.mxu0 0.0
    %327 = vmatprep.subr.mxu0 0.0
    %328 = vmatpush1.msra.mxu0 0.0
    %329 = vmatprep.subr.mxu0 0.0
    %v330 = vsub.f32 %v123, %v123
    %331 = vmatpush1.msra.mxu0 %v330
    %332 = vmatprep.subr.mxu0 0.0
    %v333 = vsub.f32 %v122, %v122
    %334 = vmatpush1.msra.mxu0 %v333
    %335 = vmatprep.subr.mxu0 0.0
    %336 = vmatpush2.msra.mxu0 0.0
    %337 = vmatprep.subr.mxu0 0.0
    %338 = vmatpush2.msra.mxu0 0.0
    %339 = vmatprep.subr.mxu0 0.0
    %340 = vmatpush2.msra.mxu0 0.0
    %341 = vmatprep.subr.mxu0 0.0
    %342 = vmatpush2.msra.mxu0 0.0
    %343 = vmatprep.subr.mxu0 0.0
    %344 = vmatpush2.msra.mxu0 0.0
    %345 = vmatprep.subr.mxu0 0.0
    %346 = vmatpush2.msra.mxu0 0.0
    %347 = vmatprep.subr.mxu0 0.0
    %348 = vmatpush2.msra.mxu0 0.0
    %349 = vmatprep.subr.mxu0 0.0
    %350 = vmatpush2.msra.mxu0 0.0
    %351 = vmatprep.subr.mxu0 0.0
    %352 = vmatpush2.msra.mxu0 0.0
    %353 = vmatprep.subr.mxu0 0.0
    %354 = vmatpush2.msra.mxu0 0.0
    %355 = vmatprep.subr.mxu0 0.0
    %356 = vmatpush2.msra.mxu0 0.0
    %357 = vmatprep.subr.mxu0 0.0
    %358 = vmatpush2.msra.mxu0 0.0
    %359 = vmatprep.subr.mxu0 0.0
    %360 = vmatpush2.msra.mxu0 0.0
    %361 = vmatprep.subr.mxu0 0.0
    %362 = vmatpush2.msra.mxu0 0.0
    %363 = vmatprep.subr.mxu0 0.0
    %364 = vmatpush2.msra.mxu0 0.0
    %365 = vmatprep.subr.mxu0 0.0
    %366 = vmatpush2.msra.mxu0 0.0
    %367 = vmatprep.mubr.f32.mxu0 0.0
    %v368 = vand.u32 %v126, 4294901760
    %v369 = vsub.f32 %v126, %v368
    %370 = vmatmul.mubr.f32.gmra.mxu0 %v369
    %v371 = vpop.f32.mrf.mxu0
    %v372 = vadd.f32 %v292, %v371
    %v373 = vpop.f32.mrf.mxu0
    %374 = vmatprep.mubr.f32.mxu0 0.0
    %v375 = vand.u32 %v129, 4294901760
    %v376 = vsub.f32 %v129, %v375
    %377 = vmatmul.mubr.f32.gmra.mxu0 %v376
    %v378 = vpop.f32.mrf.mxu0
    %v379 = vadd.f32 %v298, %v378
    %v380 = vpop.f32.mrf.mxu0
    %381 = vdwg.mxu0
    %382 = vmatprep.subr.mxu0 0.0
    %383 = vmatpush1.msra.mxu0 0.0
    %384 = vmatprep.subr.mxu0 0.0
    %385 = vmatpush1.msra.mxu0 0.0
    %386 = vmatprep.subr.mxu0 0.0
    %387 = vmatpush1.msra.mxu0 0.0
    %388 = vmatprep.subr.mxu0 0.0
    %389 = vmatpush1.msra.mxu0 0.0
    %390 = vmatprep.subr.mxu0 0.0
    %391 = vmatpush1.msra.mxu0 0.0
    %392 = vmatprep.subr.mxu0 0.0
    %393 = vmatpush1.msra.mxu0 0.0
    %394 = vmatprep.subr.mxu0 0.0
    %395 = vmatpush1.msra.mxu0 0.0
    %396 = vmatprep.subr.mxu0 0.0
    %397 = vmatpush1.msra.mxu0 0.0
    %398 = vmatprep.subr.mxu0 0.0
    %399 = vmatpush1.msra.mxu0 0.0
    %400 = vmatprep.subr.mxu0 0.0
    %401 = vmatpush1.msra.mxu0 0.0
    %402 = vmatprep.subr.mxu0 0.0
    %403 = vmatpush1.msra.mxu0 0.0
    %404 = vmatprep.subr.mxu0 0.0
    %405 = vmatpush1.msra.mxu0 0.0
    %406 = vmatprep.subr.mxu0 0.0
    %407 = vmatpush1.msra.mxu0 0.0
    %408 = vmatprep.subr.mxu0 0.0
    %409 = vmatpush1.msra.mxu0 0.0
    %410 = vmatprep.subr.mxu0 0.0
    %411 = vmatpush1.msra.mxu0 %v123
    %412 = vmatprep.subr.mxu0 0.0
    %413 = vmatpush1.msra.mxu0 %v122
    %414 = vmatprep.subr.mxu0 0.0
    %415 = vmatpush2.msra.mxu0 0.0
    %416 = vmatprep.subr.mxu0 0.0
    %417 = vmatpush2.msra.mxu0 0.0
    %418 = vmatprep.subr.mxu0 0.0
    %419 = vmatpush2.msra.mxu0 0.0
    %420 = vmatprep.subr.mxu0 0.0
    %421 = vmatpush2.msra.mxu0 0.0
    %422 = vmatprep.subr.mxu0 0.0
    %423 = vmatpush2.msra.mxu0 0.0
    %424 = vmatprep.subr.mxu0 0.0
    %425 = vmatpush2.msra.mxu0 0.0
    %426 = vmatprep.subr.mxu0 0.0
    %427 = vmatpush2.msra.mxu0 0.0
    %428 = vmatprep.subr.mxu0 0.0
    %429 = vmatpush2.msra.mxu0 0.0
    %430 = vmatprep.subr.mxu0 0.0
    %431 = vmatpush2.msra.mxu0 0.0
    %432 = vmatprep.subr.mxu0 0.0
    %433 = vmatpush2.msra.mxu0 0.0
    %434 = vmatprep.subr.mxu0 0.0
    %435 = vmatpush2.msra.mxu0 0.0
    %436 = vmatprep.subr.mxu0 0.0
    %437 = vmatpush2.msra.mxu0 0.0
    %438 = vmatprep.subr.mxu0 0.0
    %439 = vmatpush2.msra.mxu0 0.0
    %440 = vmatprep.subr.mxu0 0.0
    %441 = vmatpush2.msra.mxu0 0.0
    %442 = vmatprep.subr.mxu0 0.0
    %443 = vmatpush2.msra.mxu0 0.0
    %444 = vmatprep.subr.mxu0 0.0
    %445 = vmatpush2.msra.mxu0 0.0
    %446 = vmatprep.mubr.f32.mxu0 0.0
    %v447 = vand.u32 %v126, 4294901760
    %v448 = vsub.f32 %v126, %v447
    %v449 = vand.u32 %v448, 4294901760
    %450 = vmatmul.mubr.f32.gmra.mxu0 %v449
    %v451 = vpop.f32.mrf.mxu0
    %v452 = vadd.f32 %v372, %v451
    %v453 = vpop.f32.mrf.mxu0
    %454 = vmatprep.mubr.f32.mxu0 0.0
    %v455 = vand.u32 %v129, 4294901760
    %v456 = vsub.f32 %v129, %v455
    %v457 = vand.u32 %v456, 4294901760
    %458 = vmatmul.mubr.f32.gmra.mxu0 %v457
    %v459 = vpop.f32.mrf.mxu0
    %v460 = vadd.f32 %v379, %v459
    %v461 = vpop.f32.mrf.mxu0
    %462 = vdwg.mxu0
    %463 = vmatprep.subr.mxu0 0.0
    %464 = vmatpush1.msra.mxu0 0.0
    %465 = vmatprep.subr.mxu0 0.0
    %466 = vmatpush1.msra.mxu0 0.0
    %467 = vmatprep.subr.mxu0 0.0
    %468 = vmatpush1.msra.mxu0 0.0
    %469 = vmatprep.subr.mxu0 0.0
    %470 = vmatpush1.msra.mxu0 0.0
    %471 = vmatprep.subr.mxu0 0.0
    %472 = vmatpush1.msra.mxu0 0.0
    %473 = vmatprep.subr.mxu0 0.0
    %474 = vmatpush1.msra.mxu0 0.0
    %475 = vmatprep.subr.mxu0 0.0
    %476 = vmatpush1.msra.mxu0 0.0
    %477 = vmatprep.subr.mxu0 0.0
    %478 = vmatpush1.msra.mxu0 0.0
    %479 = vmatprep.subr.mxu0 0.0
    %480 = vmatpush1.msra.mxu0 0.0
    %481 = vmatprep.subr.mxu0 0.0
    %482 = vmatpush1.msra.mxu0 0.0
    %483 = vmatprep.subr.mxu0 0.0
    %484 = vmatpush1.msra.mxu0 0.0
    %485 = vmatprep.subr.mxu0 0.0
    %486 = vmatpush1.msra.mxu0 0.0
    %487 = vmatprep.subr.mxu0 0.0
    %488 = vmatpush1.msra.mxu0 0.0
    %489 = vmatprep.subr.mxu0 0.0
    %490 = vmatpush1.msra.mxu0 0.0
    %491 = vmatprep.subr.mxu0 0.0
    %v492 = vsub.f32 %v123, %v123
    %v493 = vand.u32 %v492, 4294901760
    %494 = vmatpush1.msra.mxu0 %v493
    %495 = vmatprep.subr.mxu0 0.0
    %v496 = vsub.f32 %v122, %v122
    %v497 = vand.u32 %v496, 4294901760
    %498 = vmatpush1.msra.mxu0 %v497
    %499 = vmatprep.subr.mxu0 0.0
    %500 = vmatpush2.msra.mxu0 0.0
    %501 = vmatprep.subr.mxu0 0.0
    %502 = vmatpush2.msra.mxu0 0.0
    %503 = vmatprep.subr.mxu0 0.0
    %504 = vmatpush2.msra.mxu0 0.0
    %505 = vmatprep.subr.mxu0 0.0
    %506 = vmatpush2.msra.mxu0 0.0
    %507 = vmatprep.subr.mxu0 0.0
    %508 = vmatpush2.msra.mxu0 0.0
    %509 = vmatprep.subr.mxu0 0.0
    %510 = vmatpush2.msra.mxu0 0.0
    %511 = vmatprep.subr.mxu0 0.0
    %512 = vmatpush2.msra.mxu0 0.0
    %513 = vmatprep.subr.mxu0 0.0
    %514 = vmatpush2.msra.mxu0 0.0
    %515 = vmatprep.subr.mxu0 0.0
    %516 = vmatpush2.msra.mxu0 0.0
    %517 = vmatprep.subr.mxu0 0.0
    %518 = vmatpush2.msra.mxu0 0.0
    %519 = vmatprep.subr.mxu0 0.0
    %520 = vmatpush2.msra.mxu0 0.0
    %521 = vmatprep.subr.mxu0 0.0
    %522 = vmatpush2.msra.mxu0 0.0
    %523 = vmatprep.subr.mxu0 0.0
    %524 = vmatpush2.msra.mxu0 0.0
    %525 = vmatprep.subr.mxu0 0.0
    %526 = vmatpush2.msra.mxu0 0.0
    %527 = vmatprep.subr.mxu0 0.0
    %528 = vmatpush2.msra.mxu0 0.0
    %529 = vmatprep.subr.mxu0 0.0
    %530 = vmatpush2.msra.mxu0 0.0
    %531 = vmatprep.mubr.f32.mxu0 0.0
    %v532 = vand.u32 %v126, 4294901760
    %533 = vmatmul.mubr.f32.gmra.mxu0 %v532
    %v534 = vpop.f32.mrf.mxu0
    %v535 = vadd.f32 %v452, %v534
    %v536 = vpop.f32.mrf.mxu0
    %537 = vmatprep.mubr.f32.mxu0 0.0
    %v538 = vand.u32 %v129, 4294901760
    %539 = vmatmul.mubr.f32.gmra.mxu0 %v538
    %v540 = vpop.f32.mrf.mxu0
    %v541 = vadd.f32 %v460, %v540
    %v542 = vpop.f32.mrf.mxu0
    %543 = vdwg.mxu0
    %544 = vmatprep.subr.mxu0 0.0
    %545 = vmatpush1.msra.mxu0 0.0
    %546 = vmatprep.subr.mxu0 0.0
    %547 = vmatpush1.msra.mxu0 0.0
    %548 = vmatprep.subr.mxu0 0.0
    %549 = vmatpush1.msra.mxu0 0.0
    %550 = vmatprep.subr.mxu0 0.0
    %551 = vmatpush1.msra.mxu0 0.0
    %552 = vmatprep.subr.mxu0 0.0
    %553 = vmatpush1.msra.mxu0 0.0
    %554 = vmatprep.subr.mxu0 0.0
    %555 = vmatpush1.msra.mxu0 0.0
    %556 = vmatprep.subr.mxu0 0.0
    %557 = vmatpush1.msra.mxu0 0.0
    %558 = vmatprep.subr.mxu0 0.0
    %559 = vmatpush1.msra.mxu0 0.0
    %560 = vmatprep.subr.mxu0 0.0
    %561 = vmatpush1.msra.mxu0 0.0
    %562 = vmatprep.subr.mxu0 0.0
    %563 = vmatpush1.msra.mxu0 0.0
    %564 = vmatprep.subr.mxu0 0.0
    %565 = vmatpush1.msra.mxu0 0.0
    %566 = vmatprep.subr.mxu0 0.0
    %567 = vmatpush1.msra.mxu0 0.0
    %568 = vmatprep.subr.mxu0 0.0
    %569 = vmatpush1.msra.mxu0 0.0
    %570 = vmatprep.subr.mxu0 0.0
    %571 = vmatpush1.msra.mxu0 0.0
    %572 = vmatprep.subr.mxu0 0.0
    %573 = vmatpush1.msra.mxu0 %v123
    %574 = vmatprep.subr.mxu0 0.0
    %575 = vmatpush1.msra.mxu0 %v122
    %576 = vmatprep.subr.mxu0 0.0
    %577 = vmatpush2.msra.mxu0 0.0
    %578 = vmatprep.subr.mxu0 0.0
    %579 = vmatpush2.msra.mxu0 0.0
    %580 = vmatprep.subr.mxu0 0.0
    %581 = vmatpush2.msra.mxu0 0.0
    %582 = vmatprep.subr.mxu0 0.0
    %583 = vmatpush2.msra.mxu0 0.0
    %584 = vmatprep.subr.mxu0 0.0
    %585 = vmatpush2.msra.mxu0 0.0
    %586 = vmatprep.subr.mxu0 0.0
    %587 = vmatpush2.msra.mxu0 0.0
    %588 = vmatprep.subr.mxu0 0.0
    %589 = vmatpush2.msra.mxu0 0.0
    %590 = vmatprep.subr.mxu0 0.0
    %591 = vmatpush2.msra.mxu0 0.0
    %592 = vmatprep.subr.mxu0 0.0
    %593 = vmatpush2.msra.mxu0 0.0
    %594 = vmatprep.subr.mxu0 0.0
    %595 = vmatpush2.msra.mxu0 0.0
    %596 = vmatprep.subr.mxu0 0.0
    %597 = vmatpush2.msra.mxu0 0.0
    %598 = vmatprep.subr.mxu0 0.0
    %599 = vmatpush2.msra.mxu0 0.0
    %600 = vmatprep.subr.mxu0 0.0
    %601 = vmatpush2.msra.mxu0 0.0
    %602 = vmatprep.subr.mxu0 0.0
    %603 = vmatpush2.msra.mxu0 0.0
    %604 = vmatprep.subr.mxu0 0.0
    %605 = vmatpush2.msra.mxu0 0.0
    %606 = vmatprep.subr.mxu0 0.0
    %607 = vmatpush2.msra.mxu0 0.0
    %608 = vmatprep.mubr.f32.mxu0 0.0
    %v609 = vand.u32 %v126, 4294901760
    %610 = vmatmul.mubr.f32.gmra.mxu0 %v609
    %v611 = vpop.f32.mrf.mxu0
    %v612 = vadd.f32 %v535, %v611
    %v613 = vpop.f32.mrf.mxu0
    %614 = vmatprep.mubr.f32.mxu0 0.0
    %v615 = vand.u32 %v129, 4294901760
    %616 = vmatmul.mubr.f32.gmra.mxu0 %v615
    %v617 = vpop.f32.mrf.mxu0
    %v618 = vadd.f32 %v541, %v617
    %v619 = vpop.f32.mrf.mxu0
    %620 = vdwg.mxu0
    %v622 = vsel %vm124, %v122, 0
    %v625 = vsel %vm124, %v123, 0
    %627 = vmatprep.subr.mxu0 0.0
    %628 = vmatpush1.msra.mxu0 0.0
    %629 = vmatprep.subr.mxu0 0.0
    %630 = vmatpush1.msra.mxu0 0.0
    %631 = vmatprep.subr.mxu0 0.0
    %632 = vmatpush1.msra.mxu0 0.0
    %633 = vmatprep.subr.mxu0 0.0
    %634 = vmatpush1.msra.mxu0 0.0
    %635 = vmatprep.subr.mxu0 0.0
    %636 = vmatpush1.msra.mxu0 0.0
    %637 = vmatprep.subr.mxu0 0.0
    %638 = vmatpush1.msra.mxu0 0.0
    %639 = vmatprep.subr.mxu0 0.0
    %640 = vmatpush1.msra.mxu0 0.0
    %641 = vmatprep.subr.mxu0 0.0
    %642 = vmatpush1.msra.mxu0 0.0
    %643 = vmatprep.subr.mxu0 0.0
    %644 = vmatpush1.msra.mxu0 0.0
    %645 = vmatprep.subr.mxu0 0.0
    %646 = vmatpush1.msra.mxu0 0.0
    %647 = vmatprep.subr.mxu0 0.0
    %648 = vmatpush1.msra.mxu0 0.0
    %649 = vmatprep.subr.mxu0 0.0
    %650 = vmatpush1.msra.mxu0 0.0
    %651 = vmatprep.subr.mxu0 0.0
    %652 = vmatpush1.msra.mxu0 0.0
    %653 = vmatprep.subr.mxu0 0.0
    %654 = vmatpush1.msra.mxu0 0.0
    %655 = vmatprep.subr.mxu0 0.0
    %v656 = vand.u32 %v100, 4294901760
    %657 = vmatpush1.msra.mxu0 %v656
    %658 = vmatprep.subr.mxu0 0.0
    %v659 = vand.u32 %v99, 4294901760
    %660 = vmatpush1.msra.mxu0 %v659
    %661 = vmatprep.subr.mxu0 0.0
    %662 = vmatpush2.msra.mxu0 0.0
    %663 = vmatprep.subr.mxu0 0.0
    %664 = vmatpush2.msra.mxu0 0.0
    %665 = vmatprep.subr.mxu0 0.0
    %666 = vmatpush2.msra.mxu0 0.0
    %667 = vmatprep.subr.mxu0 0.0
    %668 = vmatpush2.msra.mxu0 0.0
    %669 = vmatprep.subr.mxu0 0.0
    %670 = vmatpush2.msra.mxu0 0.0
    %671 = vmatprep.subr.mxu0 0.0
    %672 = vmatpush2.msra.mxu0 0.0
    %673 = vmatprep.subr.mxu0 0.0
    %674 = vmatpush2.msra.mxu0 0.0
    %675 = vmatprep.subr.mxu0 0.0
    %676 = vmatpush2.msra.mxu0 0.0
    %677 = vmatprep.subr.mxu0 0.0
    %678 = vmatpush2.msra.mxu0 0.0
    %679 = vmatprep.subr.mxu0 0.0
    %680 = vmatpush2.msra.mxu0 0.0
    %681 = vmatprep.subr.mxu0 0.0
    %682 = vmatpush2.msra.mxu0 0.0
    %683 = vmatprep.subr.mxu0 0.0
    %684 = vmatpush2.msra.mxu0 0.0
    %685 = vmatprep.subr.mxu0 0.0
    %686 = vmatpush2.msra.mxu0 0.0
    %687 = vmatprep.subr.mxu0 0.0
    %688 = vmatpush2.msra.mxu0 0.0
    %689 = vmatprep.subr.mxu0 0.0
    %690 = vmatpush2.msra.mxu0 0.0
    %691 = vmatprep.subr.mxu0 0.0
    %692 = vmatpush2.msra.mxu0 0.0
    %693 = vmatprep.mubr.f32.mxu0 0.0
    %v694 = vand.u32 %v622, 4294901760
    %v695 = vsub.f32 %v622, %v694
    %v696 = vand.u32 %v695, 4294901760
    %v697 = vsub.f32 %v695, %v696
    %v698 = vand.u32 %v697, 4294901760
    %699 = vmatmul.mubr.f32.gmra.mxu0 %v698
    %v700 = vpop.f32.mrf.mxu0
    %v701 = vadd.f32 %v612, %v700
    %v702 = vpop.f32.mrf.mxu0
    %703 = vmatprep.mubr.f32.mxu0 0.0
    %v704 = vand.u32 %v625, 4294901760
    %v705 = vsub.f32 %v625, %v704
    %v706 = vand.u32 %v705, 4294901760
    %v707 = vsub.f32 %v705, %v706
    %v708 = vand.u32 %v707, 4294901760
    %709 = vmatmul.mubr.f32.gmra.mxu0 %v708
    %v710 = vpop.f32.mrf.mxu0
    %v711 = vadd.f32 %v618, %v710
    %v712 = vpop.f32.mrf.mxu0
    %713 = vdwg.mxu0
    %714 = vmatprep.subr.mxu0 0.0
    %715 = vmatpush1.msra.mxu0 0.0
    %716 = vmatprep.subr.mxu0 0.0
    %717 = vmatpush1.msra.mxu0 0.0
    %718 = vmatprep.subr.mxu0 0.0
    %719 = vmatpush1.msra.mxu0 0.0
    %720 = vmatprep.subr.mxu0 0.0
    %721 = vmatpush1.msra.mxu0 0.0
    %722 = vmatprep.subr.mxu0 0.0
    %723 = vmatpush1.msra.mxu0 0.0
    %724 = vmatprep.subr.mxu0 0.0
    %725 = vmatpush1.msra.mxu0 0.0
    %726 = vmatprep.subr.mxu0 0.0
    %727 = vmatpush1.msra.mxu0 0.0
    %728 = vmatprep.subr.mxu0 0.0
    %729 = vmatpush1.msra.mxu0 0.0
    %730 = vmatprep.subr.mxu0 0.0
    %731 = vmatpush1.msra.mxu0 0.0
    %732 = vmatprep.subr.mxu0 0.0
    %733 = vmatpush1.msra.mxu0 0.0
    %734 = vmatprep.subr.mxu0 0.0
    %735 = vmatpush1.msra.mxu0 0.0
    %736 = vmatprep.subr.mxu0 0.0
    %737 = vmatpush1.msra.mxu0 0.0
    %738 = vmatprep.subr.mxu0 0.0
    %739 = vmatpush1.msra.mxu0 0.0
    %740 = vmatprep.subr.mxu0 0.0
    %741 = vmatpush1.msra.mxu0 0.0
    %742 = vmatprep.subr.mxu0 0.0
    %v743 = vand.u32 %v100, 4294901760
    %v744 = vsub.f32 %v100, %v743
    %v745 = vand.u32 %v744, 4294901760
    %v746 = vsub.f32 %v744, %v745
    %v747 = vand.u32 %v746, 4294901760
    %748 = vmatpush1.msra.mxu0 %v747
    %749 = vmatprep.subr.mxu0 0.0
    %v750 = vand.u32 %v99, 4294901760
    %v751 = vsub.f32 %v99, %v750
    %v752 = vand.u32 %v751, 4294901760
    %v753 = vsub.f32 %v751, %v752
    %v754 = vand.u32 %v753, 4294901760
    %755 = vmatpush1.msra.mxu0 %v754
    %756 = vmatprep.subr.mxu0 0.0
    %757 = vmatpush2.msra.mxu0 0.0
    %758 = vmatprep.subr.mxu0 0.0
    %759 = vmatpush2.msra.mxu0 0.0
    %760 = vmatprep.subr.mxu0 0.0
    %761 = vmatpush2.msra.mxu0 0.0
    %762 = vmatprep.subr.mxu0 0.0
    %763 = vmatpush2.msra.mxu0 0.0
    %764 = vmatprep.subr.mxu0 0.0
    %765 = vmatpush2.msra.mxu0 0.0
    %766 = vmatprep.subr.mxu0 0.0
    %767 = vmatpush2.msra.mxu0 0.0
    %768 = vmatprep.subr.mxu0 0.0
    %769 = vmatpush2.msra.mxu0 0.0
    %770 = vmatprep.subr.mxu0 0.0
    %771 = vmatpush2.msra.mxu0 0.0
    %772 = vmatprep.subr.mxu0 0.0
    %773 = vmatpush2.msra.mxu0 0.0
    %774 = vmatprep.subr.mxu0 0.0
    %775 = vmatpush2.msra.mxu0 0.0
    %776 = vmatprep.subr.mxu0 0.0
    %777 = vmatpush2.msra.mxu0 0.0
    %778 = vmatprep.subr.mxu0 0.0
    %779 = vmatpush2.msra.mxu0 0.0
    %780 = vmatprep.subr.mxu0 0.0
    %781 = vmatpush2.msra.mxu0 0.0
    %782 = vmatprep.subr.mxu0 0.0
    %783 = vmatpush2.msra.mxu0 0.0
    %784 = vmatprep.subr.mxu0 0.0
    %785 = vmatpush2.msra.mxu0 0.0
    %786 = vmatprep.subr.mxu0 0.0
    %787 = vmatpush2.msra.mxu0 0.0
    %788 = vmatprep.mubr.f32.mxu0 0.0
    %v789 = vand.u32 %v622, 4294901760
    %790 = vmatmul.mubr.f32.gmra.mxu0 %v789
    %v791 = vpop.f32.mrf.mxu0
    %v792 = vadd.f32 %v701, %v791
    %v793 = vpop.f32.mrf.mxu0
    %794 = vmatprep.mubr.f32.mxu0 0.0
    %v795 = vand.u32 %v625, 4294901760
    %796 = vmatmul.mubr.f32.gmra.mxu0 %v795
    %v797 = vpop.f32.mrf.mxu0
    %v798 = vadd.f32 %v711, %v797
    %v799 = vpop.f32.mrf.mxu0
    %800 = vdwg.mxu0
    %801 = vmatprep.subr.mxu0 0.0
    %802 = vmatpush1.msra.mxu0 0.0
    %803 = vmatprep.subr.mxu0 0.0
    %804 = vmatpush1.msra.mxu0 0.0
    %805 = vmatprep.subr.mxu0 0.0
    %806 = vmatpush1.msra.mxu0 0.0
    %807 = vmatprep.subr.mxu0 0.0
    %808 = vmatpush1.msra.mxu0 0.0
    %809 = vmatprep.subr.mxu0 0.0
    %810 = vmatpush1.msra.mxu0 0.0
    %811 = vmatprep.subr.mxu0 0.0
    %812 = vmatpush1.msra.mxu0 0.0
    %813 = vmatprep.subr.mxu0 0.0
    %814 = vmatpush1.msra.mxu0 0.0
    %815 = vmatprep.subr.mxu0 0.0
    %816 = vmatpush1.msra.mxu0 0.0
    %817 = vmatprep.subr.mxu0 0.0
    %818 = vmatpush1.msra.mxu0 0.0
    %819 = vmatprep.subr.mxu0 0.0
    %820 = vmatpush1.msra.mxu0 0.0
    %821 = vmatprep.subr.mxu0 0.0
    %822 = vmatpush1.msra.mxu0 0.0
    %823 = vmatprep.subr.mxu0 0.0
    %824 = vmatpush1.msra.mxu0 0.0
    %825 = vmatprep.subr.mxu0 0.0
    %826 = vmatpush1.msra.mxu0 0.0
    %827 = vmatprep.subr.mxu0 0.0
    %828 = vmatpush1.msra.mxu0 0.0
    %829 = vmatprep.subr.mxu0 0.0
    %v830 = vand.u32 %v100, 4294901760
    %v831 = vsub.f32 %v100, %v830
    %832 = vmatpush1.msra.mxu0 %v831
    %833 = vmatprep.subr.mxu0 0.0
    %v834 = vand.u32 %v99, 4294901760
    %v835 = vsub.f32 %v99, %v834
    %836 = vmatpush1.msra.mxu0 %v835
    %837 = vmatprep.subr.mxu0 0.0
    %838 = vmatpush2.msra.mxu0 0.0
    %839 = vmatprep.subr.mxu0 0.0
    %840 = vmatpush2.msra.mxu0 0.0
    %841 = vmatprep.subr.mxu0 0.0
    %842 = vmatpush2.msra.mxu0 0.0
    %843 = vmatprep.subr.mxu0 0.0
    %844 = vmatpush2.msra.mxu0 0.0
    %845 = vmatprep.subr.mxu0 0.0
    %846 = vmatpush2.msra.mxu0 0.0
    %847 = vmatprep.subr.mxu0 0.0
    %848 = vmatpush2.msra.mxu0 0.0
    %849 = vmatprep.subr.mxu0 0.0
    %850 = vmatpush2.msra.mxu0 0.0
    %851 = vmatprep.subr.mxu0 0.0
    %852 = vmatpush2.msra.mxu0 0.0
    %853 = vmatprep.subr.mxu0 0.0
    %854 = vmatpush2.msra.mxu0 0.0
    %855 = vmatprep.subr.mxu0 0.0
    %856 = vmatpush2.msra.mxu0 0.0
    %857 = vmatprep.subr.mxu0 0.0
    %858 = vmatpush2.msra.mxu0 0.0
    %859 = vmatprep.subr.mxu0 0.0
    %860 = vmatpush2.msra.mxu0 0.0
    %861 = vmatprep.subr.mxu0 0.0
    %862 = vmatpush2.msra.mxu0 0.0
    %863 = vmatprep.subr.mxu0 0.0
    %864 = vmatpush2.msra.mxu0 0.0
    %865 = vmatprep.subr.mxu0 0.0
    %866 = vmatpush2.msra.mxu0 0.0
    %867 = vmatprep.subr.mxu0 0.0
    %868 = vmatpush2.msra.mxu0 0.0
    %869 = vmatprep.mubr.f32.mxu0 0.0
    %v870 = vand.u32 %v622, 4294901760
    %v871 = vsub.f32 %v622, %v870
    %872 = vmatmul.mubr.f32.gmra.mxu0 %v871
    %v873 = vpop.f32.mrf.mxu0
    %v874 = vadd.f32 %v792, %v873
    %v875 = vpop.f32.mrf.mxu0
    %876 = vmatprep.mubr.f32.mxu0 0.0
    %v877 = vand.u32 %v625, 4294901760
    %v878 = vsub.f32 %v625, %v877
    %879 = vmatmul.mubr.f32.gmra.mxu0 %v878
    %v880 = vpop.f32.mrf.mxu0
    %v881 = vadd.f32 %v798, %v880
    %v882 = vpop.f32.mrf.mxu0
    %883 = vdwg.mxu0
    %884 = vmatprep.subr.mxu0 0.0
    %885 = vmatpush1.msra.mxu0 0.0
    %886 = vmatprep.subr.mxu0 0.0
    %887 = vmatpush1.msra.mxu0 0.0
    %888 = vmatprep.subr.mxu0 0.0
    %889 = vmatpush1.msra.mxu0 0.0
    %890 = vmatprep.subr.mxu0 0.0
    %891 = vmatpush1.msra.mxu0 0.0
    %892 = vmatprep.subr.mxu0 0.0
    %893 = vmatpush1.msra.mxu0 0.0
    %894 = vmatprep.subr.mxu0 0.0
    %895 = vmatpush1.msra.mxu0 0.0
    %896 = vmatprep.subr.mxu0 0.0
    %897 = vmatpush1.msra.mxu0 0.0
    %898 = vmatprep.subr.mxu0 0.0
    %899 = vmatpush1.msra.mxu0 0.0
    %900 = vmatprep.subr.mxu0 0.0
    %901 = vmatpush1.msra.mxu0 0.0
    %902 = vmatprep.subr.mxu0 0.0
    %903 = vmatpush1.msra.mxu0 0.0
    %904 = vmatprep.subr.mxu0 0.0
    %905 = vmatpush1.msra.mxu0 0.0
    %906 = vmatprep.subr.mxu0 0.0
    %907 = vmatpush1.msra.mxu0 0.0
    %908 = vmatprep.subr.mxu0 0.0
    %909 = vmatpush1.msra.mxu0 0.0
    %910 = vmatprep.subr.mxu0 0.0
    %911 = vmatpush1.msra.mxu0 0.0
    %912 = vmatprep.subr.mxu0 0.0
    %v913 = vand.u32 %v100, 4294901760
    %914 = vmatpush1.msra.mxu0 %v913
    %915 = vmatprep.subr.mxu0 0.0
    %v916 = vand.u32 %v99, 4294901760
    %917 = vmatpush1.msra.mxu0 %v916
    %918 = vmatprep.subr.mxu0 0.0
    %919 = vmatpush2.msra.mxu0 0.0
    %920 = vmatprep.subr.mxu0 0.0
    %921 = vmatpush2.msra.mxu0 0.0
    %922 = vmatprep.subr.mxu0 0.0
    %923 = vmatpush2.msra.mxu0 0.0
    %924 = vmatprep.subr.mxu0 0.0
    %925 = vmatpush2.msra.mxu0 0.0
    %926 = vmatprep.subr.mxu0 0.0
    %927 = vmatpush2.msra.mxu0 0.0
    %928 = vmatprep.subr.mxu0 0.0
    %929 = vmatpush2.msra.mxu0 0.0
    %930 = vmatprep.subr.mxu0 0.0
    %931 = vmatpush2.msra.mxu0 0.0
    %932 = vmatprep.subr.mxu0 0.0
    %933 = vmatpush2.msra.mxu0 0.0
    %934 = vmatprep.subr.mxu0 0.0
    %935 = vmatpush2.msra.mxu0 0.0
    %936 = vmatprep.subr.mxu0 0.0
    %937 = vmatpush2.msra.mxu0 0.0
    %938 = vmatprep.subr.mxu0 0.0
    %939 = vmatpush2.msra.mxu0 0.0
    %940 = vmatprep.subr.mxu0 0.0
    %941 = vmatpush2.msra.mxu0 0.0
    %942 = vmatprep.subr.mxu0 0.0
    %943 = vmatpush2.msra.mxu0 0.0
    %944 = vmatprep.subr.mxu0 0.0
    %945 = vmatpush2.msra.mxu0 0.0
    %946 = vmatprep.subr.mxu0 0.0
    %947 = vmatpush2.msra.mxu0 0.0
    %948 = vmatprep.subr.mxu0 0.0
    %949 = vmatpush2.msra.mxu0 0.0
    %950 = vmatprep.mubr.f32.mxu0 0.0
    %v951 = vand.u32 %v622, 4294901760
    %v952 = vsub.f32 %v622, %v951
    %v953 = vand.u32 %v952, 4294901760
    %954 = vmatmul.mubr.f32.gmra.mxu0 %v953
    %v955 = vpop.f32.mrf.mxu0
    %v956 = vadd.f32 %v874, %v955
    %v957 = vpop.f32.mrf.mxu0
    %958 = vmatprep.mubr.f32.mxu0 0.0
    %v959 = vand.u32 %v625, 4294901760
    %v960 = vsub.f32 %v625, %v959
    %v961 = vand.u32 %v960, 4294901760
    %962 = vmatmul.mubr.f32.gmra.mxu0 %v961
    %v963 = vpop.f32.mrf.mxu0
    %v964 = vadd.f32 %v881, %v963
    %v965 = vpop.f32.mrf.mxu0
    %966 = vdwg.mxu0
    %967 = vmatprep.subr.mxu0 0.0
    %968 = vmatpush1.msra.mxu0 0.0
    %969 = vmatprep.subr.mxu0 0.0
    %970 = vmatpush1.msra.mxu0 0.0
    %971 = vmatprep.subr.mxu0 0.0
    %972 = vmatpush1.msra.mxu0 0.0
    %973 = vmatprep.subr.mxu0 0.0
    %974 = vmatpush1.msra.mxu0 0.0
    %975 = vmatprep.subr.mxu0 0.0
    %976 = vmatpush1.msra.mxu0 0.0
    %977 = vmatprep.subr.mxu0 0.0
    %978 = vmatpush1.msra.mxu0 0.0
    %979 = vmatprep.subr.mxu0 0.0
    %980 = vmatpush1.msra.mxu0 0.0
    %981 = vmatprep.subr.mxu0 0.0
    %982 = vmatpush1.msra.mxu0 0.0
    %983 = vmatprep.subr.mxu0 0.0
    %984 = vmatpush1.msra.mxu0 0.0
    %985 = vmatprep.subr.mxu0 0.0
    %986 = vmatpush1.msra.mxu0 0.0
    %987 = vmatprep.subr.mxu0 0.0
    %988 = vmatpush1.msra.mxu0 0.0
    %989 = vmatprep.subr.mxu0 0.0
    %990 = vmatpush1.msra.mxu0 0.0
    %991 = vmatprep.subr.mxu0 0.0
    %992 = vmatpush1.msra.mxu0 0.0
    %993 = vmatprep.subr.mxu0 0.0
    %994 = vmatpush1.msra.mxu0 0.0
    %995 = vmatprep.subr.mxu0 0.0
    %v996 = vand.u32 %v100, 4294901760
    %v997 = vsub.f32 %v100, %v996
    %v998 = vand.u32 %v997, 4294901760
    %999 = vmatpush1.msra.mxu0 %v998
    %1000 = vmatprep.subr.mxu0 0.0
    %v1001 = vand.u32 %v99, 4294901760
    %v1002 = vsub.f32 %v99, %v1001
    %v1003 = vand.u32 %v1002, 4294901760
    %1004 = vmatpush1.msra.mxu0 %v1003
    %1005 = vmatprep.subr.mxu0 0.0
    %1006 = vmatpush2.msra.mxu0 0.0
    %1007 = vmatprep.subr.mxu0 0.0
    %1008 = vmatpush2.msra.mxu0 0.0
    %1009 = vmatprep.subr.mxu0 0.0
    %1010 = vmatpush2.msra.mxu0 0.0
    %1011 = vmatprep.subr.mxu0 0.0
    %1012 = vmatpush2.msra.mxu0 0.0
    %1013 = vmatprep.subr.mxu0 0.0
    %1014 = vmatpush2.msra.mxu0 0.0
    %1015 = vmatprep.subr.mxu0 0.0
    %1016 = vmatpush2.msra.mxu0 0.0
    %1017 = vmatprep.subr.mxu0 0.0
    %1018 = vmatpush2.msra.mxu0 0.0
    %1019 = vmatprep.subr.mxu0 0.0
    %1020 = vmatpush2.msra.mxu0 0.0
    %1021 = vmatprep.subr.mxu0 0.0
    %1022 = vmatpush2.msra.mxu0 0.0
    %1023 = vmatprep.subr.mxu0 0.0
    %1024 = vmatpush2.msra.mxu0 0.0
    %1025 = vmatprep.subr.mxu0 0.0
    %1026 = vmatpush2.msra.mxu0 0.0
    %1027 = vmatprep.subr.mxu0 0.0
    %1028 = vmatpush2.msra.mxu0 0.0
    %1029 = vmatprep.subr.mxu0 0.0
    %1030 = vmatpush2.msra.mxu0 0.0
    %1031 = vmatprep.subr.mxu0 0.0
    %1032 = vmatpush2.msra.mxu0 0.0
    %1033 = vmatprep.subr.mxu0 0.0
    %1034 = vmatpush2.msra.mxu0 0.0
    %1035 = vmatprep.subr.mxu0 0.0
    %1036 = vmatpush2.msra.mxu0 0.0
    %1037 = vmatprep.mubr.f32.mxu0 0.0
    %v1038 = vand.u32 %v622, 4294901760
    %1039 = vmatmul.mubr.f32.gmra.mxu0 %v1038
    %v1040 = vpop.f32.mrf.mxu0
    %v1041 = vadd.f32 %v956, %v1040
    %v1042 = vpop.f32.mrf.mxu0
    %1043 = vmatprep.mubr.f32.mxu0 0.0
    %v1044 = vand.u32 %v625, 4294901760
    %1045 = vmatmul.mubr.f32.gmra.mxu0 %v1044
    %v1046 = vpop.f32.mrf.mxu0
    %v1047 = vadd.f32 %v964, %v1046
    %v1048 = vpop.f32.mrf.mxu0
    %1049 = vdwg.mxu0
    %1050 = vmatprep.subr.mxu0 0.0
    %1051 = vmatpush1.msra.mxu0 0.0
    %1052 = vmatprep.subr.mxu0 0.0
    %1053 = vmatpush1.msra.mxu0 0.0
    %1054 = vmatprep.subr.mxu0 0.0
    %1055 = vmatpush1.msra.mxu0 0.0
    %1056 = vmatprep.subr.mxu0 0.0
    %1057 = vmatpush1.msra.mxu0 0.0
    %1058 = vmatprep.subr.mxu0 0.0
    %1059 = vmatpush1.msra.mxu0 0.0
    %1060 = vmatprep.subr.mxu0 0.0
    %1061 = vmatpush1.msra.mxu0 0.0
    %1062 = vmatprep.subr.mxu0 0.0
    %1063 = vmatpush1.msra.mxu0 0.0
    %1064 = vmatprep.subr.mxu0 0.0
    %1065 = vmatpush1.msra.mxu0 0.0
    %1066 = vmatprep.subr.mxu0 0.0
    %1067 = vmatpush1.msra.mxu0 0.0
    %1068 = vmatprep.subr.mxu0 0.0
    %1069 = vmatpush1.msra.mxu0 0.0
    %1070 = vmatprep.subr.mxu0 0.0
    %1071 = vmatpush1.msra.mxu0 0.0
    %1072 = vmatprep.subr.mxu0 0.0
    %1073 = vmatpush1.msra.mxu0 0.0
    %1074 = vmatprep.subr.mxu0 0.0
    %1075 = vmatpush1.msra.mxu0 0.0
    %1076 = vmatprep.subr.mxu0 0.0
    %1077 = vmatpush1.msra.mxu0 0.0
    %1078 = vmatprep.subr.mxu0 0.0
    %v1079 = vand.u32 %v100, 4294901760
    %1080 = vmatpush1.msra.mxu0 %v1079
    %1081 = vmatprep.subr.mxu0 0.0
    %v1082 = vand.u32 %v99, 4294901760
    %1083 = vmatpush1.msra.mxu0 %v1082
    %1084 = vmatprep.subr.mxu0 0.0
    %1085 = vmatpush2.msra.mxu0 0.0
    %1086 = vmatprep.subr.mxu0 0.0
    %1087 = vmatpush2.msra.mxu0 0.0
    %1088 = vmatprep.subr.mxu0 0.0
    %1089 = vmatpush2.msra.mxu0 0.0
    %1090 = vmatprep.subr.mxu0 0.0
    %1091 = vmatpush2.msra.mxu0 0.0
    %1092 = vmatprep.subr.mxu0 0.0
    %1093 = vmatpush2.msra.mxu0 0.0
    %1094 = vmatprep.subr.mxu0 0.0
    %1095 = vmatpush2.msra.mxu0 0.0
    %1096 = vmatprep.subr.mxu0 0.0
    %1097 = vmatpush2.msra.mxu0 0.0
    %1098 = vmatprep.subr.mxu0 0.0
    %1099 = vmatpush2.msra.mxu0 0.0
    %1100 = vmatprep.subr.mxu0 0.0
    %1101 = vmatpush2.msra.mxu0 0.0
    %1102 = vmatprep.subr.mxu0 0.0
    %1103 = vmatpush2.msra.mxu0 0.0
    %1104 = vmatprep.subr.mxu0 0.0
    %1105 = vmatpush2.msra.mxu0 0.0
    %1106 = vmatprep.subr.mxu0 0.0
    %1107 = vmatpush2.msra.mxu0 0.0
    %1108 = vmatprep.subr.mxu0 0.0
    %1109 = vmatpush2.msra.mxu0 0.0
    %1110 = vmatprep.subr.mxu0 0.0
    %1111 = vmatpush2.msra.mxu0 0.0
    %1112 = vmatprep.subr.mxu0 0.0
    %1113 = vmatpush2.msra.mxu0 0.0
    %1114 = vmatprep.subr.mxu0 0.0
    %1115 = vmatpush2.msra.mxu0 0.0
    %1116 = vmatprep.mubr.f32.mxu0 0.0
    %v1117 = vand.u32 %v622, 4294901760
    %1118 = vmatmul.mubr.f32.gmra.mxu0 %v1117
    %v1119 = vpop.f32.mrf.mxu0
    %v1120 = vadd.f32 %v1041, %v1119
    %v1121 = vpop.f32.mrf.mxu0
    %1122 = vmatprep.mubr.f32.mxu0 0.0
    %v1123 = vand.u32 %v625, 4294901760
    %1124 = vmatmul.mubr.f32.gmra.mxu0 %v1123
    %v1125 = vpop.f32.mrf.mxu0
    %v1126 = vadd.f32 %v1047, %v1125
    %v1127 = vpop.f32.mrf.mxu0
    %1128 = vdwg.mxu0
    %v1129 = vand.u32 2147483647, %v1120
    %v1130 = vand.u32 2147483647, %v1126
    %v1131 = vsel %vm124, %v1129, 0.0
    %v1132 = vsel %vm124, %v1130, 0.0
    %v1133 = vadd.f32 %v1131, %v1132
    %v1134 = vrot.slane %v1133, 4
    %v1135 = vadd.f32 %v1133, %v1134
    %v1136 = vrot.slane %v1135, 2
    %v1137 = vadd.f32 %v1135, %v1136
    %v1138 = vrot.slane %v1137, 1
    %v1139 = vadd.f32 %v1137, %v1138
    %v1140 = vadd.f32 %v1139, 0.0
    %v1142 = vsel %vm124, %v101, 0
    %v1145 = vsel %vm124, %v102, 0
    %1147 = vmatprep.subr.mxu0 0.0
    %1148 = vmatpush1.msra.mxu0 0.0
    %1149 = vmatprep.subr.mxu0 0.0
    %1150 = vmatpush1.msra.mxu0 0.0
    %1151 = vmatprep.subr.mxu0 0.0
    %1152 = vmatpush1.msra.mxu0 0.0
    %1153 = vmatprep.subr.mxu0 0.0
    %1154 = vmatpush1.msra.mxu0 0.0
    %1155 = vmatprep.subr.mxu0 0.0
    %1156 = vmatpush1.msra.mxu0 0.0
    %1157 = vmatprep.subr.mxu0 0.0
    %1158 = vmatpush1.msra.mxu0 0.0
    %1159 = vmatprep.subr.mxu0 0.0
    %1160 = vmatpush1.msra.mxu0 0.0
    %1161 = vmatprep.subr.mxu0 0.0
    %1162 = vmatpush1.msra.mxu0 0.0
    %1163 = vmatprep.subr.mxu0 0.0
    %1164 = vmatpush1.msra.mxu0 0.0
    %1165 = vmatprep.subr.mxu0 0.0
    %1166 = vmatpush1.msra.mxu0 0.0
    %1167 = vmatprep.subr.mxu0 0.0
    %1168 = vmatpush1.msra.mxu0 0.0
    %1169 = vmatprep.subr.mxu0 0.0
    %1170 = vmatpush1.msra.mxu0 0.0
    %1171 = vmatprep.subr.mxu0 0.0
    %1172 = vmatpush1.msra.mxu0 0.0
    %1173 = vmatprep.subr.mxu0 0.0
    %1174 = vmatpush1.msra.mxu0 0.0
    %1175 = vmatprep.subr.mxu0 0.0
    %1176 = vmatpush1.msra.mxu0 %v123
    %1177 = vmatprep.subr.mxu0 0.0
    %1178 = vmatpush1.msra.mxu0 %v122
    %1179 = vmatprep.subr.mxu0 0.0
    %1180 = vmatpush2.msra.mxu0 0.0
    %1181 = vmatprep.subr.mxu0 0.0
    %1182 = vmatpush2.msra.mxu0 0.0
    %1183 = vmatprep.subr.mxu0 0.0
    %1184 = vmatpush2.msra.mxu0 0.0
    %1185 = vmatprep.subr.mxu0 0.0
    %1186 = vmatpush2.msra.mxu0 0.0
    %1187 = vmatprep.subr.mxu0 0.0
    %1188 = vmatpush2.msra.mxu0 0.0
    %1189 = vmatprep.subr.mxu0 0.0
    %1190 = vmatpush2.msra.mxu0 0.0
    %1191 = vmatprep.subr.mxu0 0.0
    %1192 = vmatpush2.msra.mxu0 0.0
    %1193 = vmatprep.subr.mxu0 0.0
    %1194 = vmatpush2.msra.mxu0 0.0
    %1195 = vmatprep.subr.mxu0 0.0
    %1196 = vmatpush2.msra.mxu0 0.0
    %1197 = vmatprep.subr.mxu0 0.0
    %1198 = vmatpush2.msra.mxu0 0.0
    %1199 = vmatprep.subr.mxu0 0.0
    %1200 = vmatpush2.msra.mxu0 0.0
    %1201 = vmatprep.subr.mxu0 0.0
    %1202 = vmatpush2.msra.mxu0 0.0
    %1203 = vmatprep.subr.mxu0 0.0
    %1204 = vmatpush2.msra.mxu0 0.0
    %1205 = vmatprep.subr.mxu0 0.0
    %1206 = vmatpush2.msra.mxu0 0.0
    %1207 = vmatprep.subr.mxu0 0.0
    %1208 = vmatpush2.msra.mxu0 0.0
    %1209 = vmatprep.subr.mxu0 0.0
    %1210 = vmatpush2.msra.mxu0 0.0
    %1211 = vmatprep.mubr.f32.mxu0 0.0
    %v1212 = vand.u32 %v1142, 4294901760
    %v1213 = vsub.f32 %v1142, %v1212
    %v1214 = vand.u32 %v1213, 4294901760
    %v1215 = vsub.f32 %v1213, %v1214
    %v1216 = vand.u32 %v1215, 4294901760
    %1217 = vmatmul.mubr.f32.gmra.mxu0 %v1216
    %v1218 = vpop.f32.mrf.mxu0
    %v1219 = vadd.f32 0.0, %v1218
    %v1220 = vpop.f32.mrf.mxu0
    %1221 = vmatprep.mubr.f32.mxu0 0.0
    %v1222 = vand.u32 %v1145, 4294901760
    %v1223 = vsub.f32 %v1145, %v1222
    %v1224 = vand.u32 %v1223, 4294901760
    %v1225 = vsub.f32 %v1223, %v1224
    %v1226 = vand.u32 %v1225, 4294901760
    %1227 = vmatmul.mubr.f32.gmra.mxu0 %v1226
    %v1228 = vpop.f32.mrf.mxu0
    %v1229 = vadd.f32 0.0, %v1228
    %v1230 = vpop.f32.mrf.mxu0
    %1231 = vdwg.mxu0
    %1232 = vmatprep.subr.mxu0 0.0
    %1233 = vmatpush1.msra.mxu0 0.0
    %1234 = vmatprep.subr.mxu0 0.0
    %1235 = vmatpush1.msra.mxu0 0.0
    %1236 = vmatprep.subr.mxu0 0.0
    %1237 = vmatpush1.msra.mxu0 0.0
    %1238 = vmatprep.subr.mxu0 0.0
    %1239 = vmatpush1.msra.mxu0 0.0
    %1240 = vmatprep.subr.mxu0 0.0
    %1241 = vmatpush1.msra.mxu0 0.0
    %1242 = vmatprep.subr.mxu0 0.0
    %1243 = vmatpush1.msra.mxu0 0.0
    %1244 = vmatprep.subr.mxu0 0.0
    %1245 = vmatpush1.msra.mxu0 0.0
    %1246 = vmatprep.subr.mxu0 0.0
    %1247 = vmatpush1.msra.mxu0 0.0
    %1248 = vmatprep.subr.mxu0 0.0
    %1249 = vmatpush1.msra.mxu0 0.0
    %1250 = vmatprep.subr.mxu0 0.0
    %1251 = vmatpush1.msra.mxu0 0.0
    %1252 = vmatprep.subr.mxu0 0.0
    %1253 = vmatpush1.msra.mxu0 0.0
    %1254 = vmatprep.subr.mxu0 0.0
    %1255 = vmatpush1.msra.mxu0 0.0
    %1256 = vmatprep.subr.mxu0 0.0
    %1257 = vmatpush1.msra.mxu0 0.0
    %1258 = vmatprep.subr.mxu0 0.0
    %1259 = vmatpush1.msra.mxu0 0.0
    %1260 = vmatprep.subr.mxu0 0.0
    %v1261 = vsub.f32 %v123, %v123
    %v1262 = vand.u32 %v1261, 4294901760
    %v1263 = vsub.f32 %v1261, %v1262
    %v1264 = vand.u32 %v1263, 4294901760
    %1265 = vmatpush1.msra.mxu0 %v1264
    %1266 = vmatprep.subr.mxu0 0.0
    %v1267 = vsub.f32 %v122, %v122
    %v1268 = vand.u32 %v1267, 4294901760
    %v1269 = vsub.f32 %v1267, %v1268
    %v1270 = vand.u32 %v1269, 4294901760
    %1271 = vmatpush1.msra.mxu0 %v1270
    %1272 = vmatprep.subr.mxu0 0.0
    %1273 = vmatpush2.msra.mxu0 0.0
    %1274 = vmatprep.subr.mxu0 0.0
    %1275 = vmatpush2.msra.mxu0 0.0
    %1276 = vmatprep.subr.mxu0 0.0
    %1277 = vmatpush2.msra.mxu0 0.0
    %1278 = vmatprep.subr.mxu0 0.0
    %1279 = vmatpush2.msra.mxu0 0.0
    %1280 = vmatprep.subr.mxu0 0.0
    %1281 = vmatpush2.msra.mxu0 0.0
    %1282 = vmatprep.subr.mxu0 0.0
    %1283 = vmatpush2.msra.mxu0 0.0
    %1284 = vmatprep.subr.mxu0 0.0
    %1285 = vmatpush2.msra.mxu0 0.0
    %1286 = vmatprep.subr.mxu0 0.0
    %1287 = vmatpush2.msra.mxu0 0.0
    %1288 = vmatprep.subr.mxu0 0.0
    %1289 = vmatpush2.msra.mxu0 0.0
    %1290 = vmatprep.subr.mxu0 0.0
    %1291 = vmatpush2.msra.mxu0 0.0
    %1292 = vmatprep.subr.mxu0 0.0
    %1293 = vmatpush2.msra.mxu0 0.0
    %1294 = vmatprep.subr.mxu0 0.0
    %1295 = vmatpush2.msra.mxu0 0.0
    %1296 = vmatprep.subr.mxu0 0.0
    %1297 = vmatpush2.msra.mxu0 0.0
    %1298 = vmatprep.subr.mxu0 0.0
    %1299 = vmatpush2.msra.mxu0 0.0
    %1300 = vmatprep.subr.mxu0 0.0
    %1301 = vmatpush2.msra.mxu0 0.0
    %1302 = vmatprep.subr.mxu0 0.0
    %1303 = vmatpush2.msra.mxu0 0.0
    %1304 = vmatprep.mubr.f32.mxu0 0.0
    %v1305 = vand.u32 %v1142, 4294901760
    %1306 = vmatmul.mubr.f32.gmra.mxu0 %v1305
    %v1307 = vpop.f32.mrf.mxu0
    %v1308 = vadd.f32 %v1219, %v1307
    %v1309 = vpop.f32.mrf.mxu0
    %1310 = vmatprep.mubr.f32.mxu0 0.0
    %v1311 = vand.u32 %v1145, 4294901760
    %1312 = vmatmul.mubr.f32.gmra.mxu0 %v1311
    %v1313 = vpop.f32.mrf.mxu0
    %v1314 = vadd.f32 %v1229, %v1313
    %v1315 = vpop.f32.mrf.mxu0
    %1316 = vdwg.mxu0
    %1317 = vmatprep.subr.mxu0 0.0
    %1318 = vmatpush1.msra.mxu0 0.0
    %1319 = vmatprep.subr.mxu0 0.0
    %1320 = vmatpush1.msra.mxu0 0.0
    %1321 = vmatprep.subr.mxu0 0.0
    %1322 = vmatpush1.msra.mxu0 0.0
    %1323 = vmatprep.subr.mxu0 0.0
    %1324 = vmatpush1.msra.mxu0 0.0
    %1325 = vmatprep.subr.mxu0 0.0
    %1326 = vmatpush1.msra.mxu0 0.0
    %1327 = vmatprep.subr.mxu0 0.0
    %1328 = vmatpush1.msra.mxu0 0.0
    %1329 = vmatprep.subr.mxu0 0.0
    %1330 = vmatpush1.msra.mxu0 0.0
    %1331 = vmatprep.subr.mxu0 0.0
    %1332 = vmatpush1.msra.mxu0 0.0
    %1333 = vmatprep.subr.mxu0 0.0
    %1334 = vmatpush1.msra.mxu0 0.0
    %1335 = vmatprep.subr.mxu0 0.0
    %1336 = vmatpush1.msra.mxu0 0.0
    %1337 = vmatprep.subr.mxu0 0.0
    %1338 = vmatpush1.msra.mxu0 0.0
    %1339 = vmatprep.subr.mxu0 0.0
    %1340 = vmatpush1.msra.mxu0 0.0
    %1341 = vmatprep.subr.mxu0 0.0
    %1342 = vmatpush1.msra.mxu0 0.0
    %1343 = vmatprep.subr.mxu0 0.0
    %1344 = vmatpush1.msra.mxu0 0.0
    %1345 = vmatprep.subr.mxu0 0.0
    %v1346 = vsub.f32 %v123, %v123
    %1347 = vmatpush1.msra.mxu0 %v1346
    %1348 = vmatprep.subr.mxu0 0.0
    %v1349 = vsub.f32 %v122, %v122
    %1350 = vmatpush1.msra.mxu0 %v1349
    %1351 = vmatprep.subr.mxu0 0.0
    %1352 = vmatpush2.msra.mxu0 0.0
    %1353 = vmatprep.subr.mxu0 0.0
    %1354 = vmatpush2.msra.mxu0 0.0
    %1355 = vmatprep.subr.mxu0 0.0
    %1356 = vmatpush2.msra.mxu0 0.0
    %1357 = vmatprep.subr.mxu0 0.0
    %1358 = vmatpush2.msra.mxu0 0.0
    %1359 = vmatprep.subr.mxu0 0.0
    %1360 = vmatpush2.msra.mxu0 0.0
    %1361 = vmatprep.subr.mxu0 0.0
    %1362 = vmatpush2.msra.mxu0 0.0
    %1363 = vmatprep.subr.mxu0 0.0
    %1364 = vmatpush2.msra.mxu0 0.0
    %1365 = vmatprep.subr.mxu0 0.0
    %1366 = vmatpush2.msra.mxu0 0.0
    %1367 = vmatprep.subr.mxu0 0.0
    %1368 = vmatpush2.msra.mxu0 0.0
    %1369 = vmatprep.subr.mxu0 0.0
    %1370 = vmatpush2.msra.mxu0 0.0
    %1371 = vmatprep.subr.mxu0 0.0
    %1372 = vmatpush2.msra.mxu0 0.0
    %1373 = vmatprep.subr.mxu0 0.0
    %1374 = vmatpush2.msra.mxu0 0.0
    %1375 = vmatprep.subr.mxu0 0.0
    %1376 = vmatpush2.msra.mxu0 0.0
    %1377 = vmatprep.subr.mxu0 0.0
    %1378 = vmatpush2.msra.mxu0 0.0
    %1379 = vmatprep.subr.mxu0 0.0
    %1380 = vmatpush2.msra.mxu0 0.0
    %1381 = vmatprep.subr.mxu0 0.0
    %1382 = vmatpush2.msra.mxu0 0.0
    %1383 = vmatprep.mubr.f32.mxu0 0.0
    %v1384 = vand.u32 %v1142, 4294901760
    %v1385 = vsub.f32 %v1142, %v1384
    %1386 = vmatmul.mubr.f32.gmra.mxu0 %v1385
    %v1387 = vpop.f32.mrf.mxu0
    %v1388 = vadd.f32 %v1308, %v1387
    %v1389 = vpop.f32.mrf.mxu0
    %1390 = vmatprep.mubr.f32.mxu0 0.0
    %v1391 = vand.u32 %v1145, 4294901760
    %v1392 = vsub.f32 %v1145, %v1391
    %1393 = vmatmul.mubr.f32.gmra.mxu0 %v1392
    %v1394 = vpop.f32.mrf.mxu0
    %v1395 = vadd.f32 %v1314, %v1394
    %v1396 = vpop.f32.mrf.mxu0
    %1397 = vdwg.mxu0
    %1398 = vmatprep.subr.mxu0 0.0
    %1399 = vmatpush1.msra.mxu0 0.0
    %1400 = vmatprep.subr.mxu0 0.0
    %1401 = vmatpush1.msra.mxu0 0.0
    %1402 = vmatprep.subr.mxu0 0.0
    %1403 = vmatpush1.msra.mxu0 0.0
    %1404 = vmatprep.subr.mxu0 0.0
    %1405 = vmatpush1.msra.mxu0 0.0
    %1406 = vmatprep.subr.mxu0 0.0
    %1407 = vmatpush1.msra.mxu0 0.0
    %1408 = vmatprep.subr.mxu0 0.0
    %1409 = vmatpush1.msra.mxu0 0.0
    %1410 = vmatprep.subr.mxu0 0.0
    %1411 = vmatpush1.msra.mxu0 0.0
    %1412 = vmatprep.subr.mxu0 0.0
    %1413 = vmatpush1.msra.mxu0 0.0
    %1414 = vmatprep.subr.mxu0 0.0
    %1415 = vmatpush1.msra.mxu0 0.0
    %1416 = vmatprep.subr.mxu0 0.0
    %1417 = vmatpush1.msra.mxu0 0.0
    %1418 = vmatprep.subr.mxu0 0.0
    %1419 = vmatpush1.msra.mxu0 0.0
    %1420 = vmatprep.subr.mxu0 0.0
    %1421 = vmatpush1.msra.mxu0 0.0
    %1422 = vmatprep.subr.mxu0 0.0
    %1423 = vmatpush1.msra.mxu0 0.0
    %1424 = vmatprep.subr.mxu0 0.0
    %1425 = vmatpush1.msra.mxu0 0.0
    %1426 = vmatprep.subr.mxu0 0.0
    %1427 = vmatpush1.msra.mxu0 %v123
    %1428 = vmatprep.subr.mxu0 0.0
    %1429 = vmatpush1.msra.mxu0 %v122
    %1430 = vmatprep.subr.mxu0 0.0
    %1431 = vmatpush2.msra.mxu0 0.0
    %1432 = vmatprep.subr.mxu0 0.0
    %1433 = vmatpush2.msra.mxu0 0.0
    %1434 = vmatprep.subr.mxu0 0.0
    %1435 = vmatpush2.msra.mxu0 0.0
    %1436 = vmatprep.subr.mxu0 0.0
    %1437 = vmatpush2.msra.mxu0 0.0
    %1438 = vmatprep.subr.mxu0 0.0
    %1439 = vmatpush2.msra.mxu0 0.0
    %1440 = vmatprep.subr.mxu0 0.0
    %1441 = vmatpush2.msra.mxu0 0.0
    %1442 = vmatprep.subr.mxu0 0.0
    %1443 = vmatpush2.msra.mxu0 0.0
    %1444 = vmatprep.subr.mxu0 0.0
    %1445 = vmatpush2.msra.mxu0 0.0
    %1446 = vmatprep.subr.mxu0 0.0
    %1447 = vmatpush2.msra.mxu0 0.0
    %1448 = vmatprep.subr.mxu0 0.0
    %1449 = vmatpush2.msra.mxu0 0.0
    %1450 = vmatprep.subr.mxu0 0.0
    %1451 = vmatpush2.msra.mxu0 0.0
    %1452 = vmatprep.subr.mxu0 0.0
    %1453 = vmatpush2.msra.mxu0 0.0
    %1454 = vmatprep.subr.mxu0 0.0
    %1455 = vmatpush2.msra.mxu0 0.0
    %1456 = vmatprep.subr.mxu0 0.0
    %1457 = vmatpush2.msra.mxu0 0.0
    %1458 = vmatprep.subr.mxu0 0.0
    %1459 = vmatpush2.msra.mxu0 0.0
    %1460 = vmatprep.subr.mxu0 0.0
    %1461 = vmatpush2.msra.mxu0 0.0
    %1462 = vmatprep.mubr.f32.mxu0 0.0
    %v1463 = vand.u32 %v1142, 4294901760
    %v1464 = vsub.f32 %v1142, %v1463
    %v1465 = vand.u32 %v1464, 4294901760
    %1466 = vmatmul.mubr.f32.gmra.mxu0 %v1465
    %v1467 = vpop.f32.mrf.mxu0
    %v1468 = vadd.f32 %v1388, %v1467
    %v1469 = vpop.f32.mrf.mxu0
    %1470 = vmatprep.mubr.f32.mxu0 0.0
    %v1471 = vand.u32 %v1145, 4294901760
    %v1472 = vsub.f32 %v1145, %v1471
    %v1473 = vand.u32 %v1472, 4294901760
    %1474 = vmatmul.mubr.f32.gmra.mxu0 %v1473
    %v1475 = vpop.f32.mrf.mxu0
    %v1476 = vadd.f32 %v1395, %v1475
    %v1477 = vpop.f32.mrf.mxu0
    %1478 = vdwg.mxu0
    %1479 = vmatprep.subr.mxu0 0.0
    %1480 = vmatpush1.msra.mxu0 0.0
    %1481 = vmatprep.subr.mxu0 0.0
    %1482 = vmatpush1.msra.mxu0 0.0
    %1483 = vmatprep.subr.mxu0 0.0
    %1484 = vmatpush1.msra.mxu0 0.0
    %1485 = vmatprep.subr.mxu0 0.0
    %1486 = vmatpush1.msra.mxu0 0.0
    %1487 = vmatprep.subr.mxu0 0.0
    %1488 = vmatpush1.msra.mxu0 0.0
    %1489 = vmatprep.subr.mxu0 0.0
    %1490 = vmatpush1.msra.mxu0 0.0
    %1491 = vmatprep.subr.mxu0 0.0
    %1492 = vmatpush1.msra.mxu0 0.0
    %1493 = vmatprep.subr.mxu0 0.0
    %1494 = vmatpush1.msra.mxu0 0.0
    %1495 = vmatprep.subr.mxu0 0.0
    %1496 = vmatpush1.msra.mxu0 0.0
    %1497 = vmatprep.subr.mxu0 0.0
    %1498 = vmatpush1.msra.mxu0 0.0
    %1499 = vmatprep.subr.mxu0 0.0
    %1500 = vmatpush1.msra.mxu0 0.0
    %1501 = vmatprep.subr.mxu0 0.0
    %1502 = vmatpush1.msra.mxu0 0.0
    %1503 = vmatprep.subr.mxu0 0.0
    %1504 = vmatpush1.msra.mxu0 0.0
    %1505 = vmatprep.subr.mxu0 0.0
    %1506 = vmatpush1.msra.mxu0 0.0
    %1507 = vmatprep.subr.mxu0 0.0
    %v1508 = vsub.f32 %v123, %v123
    %v1509 = vand.u32 %v1508, 4294901760
    %1510 = vmatpush1.msra.mxu0 %v1509
    %1511 = vmatprep.subr.mxu0 0.0
    %v1512 = vsub.f32 %v122, %v122
    %v1513 = vand.u32 %v1512, 4294901760
    %1514 = vmatpush1.msra.mxu0 %v1513
    %1515 = vmatprep.subr.mxu0 0.0
    %1516 = vmatpush2.msra.mxu0 0.0
    %1517 = vmatprep.subr.mxu0 0.0
    %1518 = vmatpush2.msra.mxu0 0.0
    %1519 = vmatprep.subr.mxu0 0.0
    %1520 = vmatpush2.msra.mxu0 0.0
    %1521 = vmatprep.subr.mxu0 0.0
    %1522 = vmatpush2.msra.mxu0 0.0
    %1523 = vmatprep.subr.mxu0 0.0
    %1524 = vmatpush2.msra.mxu0 0.0
    %1525 = vmatprep.subr.mxu0 0.0
    %1526 = vmatpush2.msra.mxu0 0.0
    %1527 = vmatprep.subr.mxu0 0.0
    %1528 = vmatpush2.msra.mxu0 0.0
    %1529 = vmatprep.subr.mxu0 0.0
    %1530 = vmatpush2.msra.mxu0 0.0
    %1531 = vmatprep.subr.mxu0 0.0
    %1532 = vmatpush2.msra.mxu0 0.0
    %1533 = vmatprep.subr.mxu0 0.0
    %1534 = vmatpush2.msra.mxu0 0.0
    %1535 = vmatprep.subr.mxu0 0.0
    %1536 = vmatpush2.msra.mxu0 0.0
    %1537 = vmatprep.subr.mxu0 0.0
    %1538 = vmatpush2.msra.mxu0 0.0
    %1539 = vmatprep.subr.mxu0 0.0
    %1540 = vmatpush2.msra.mxu0 0.0
    %1541 = vmatprep.subr.mxu0 0.0
    %1542 = vmatpush2.msra.mxu0 0.0
    %1543 = vmatprep.subr.mxu0 0.0
    %1544 = vmatpush2.msra.mxu0 0.0
    %1545 = vmatprep.subr.mxu0 0.0
    %1546 = vmatpush2.msra.mxu0 0.0
    %1547 = vmatprep.mubr.f32.mxu0 0.0
    %v1548 = vand.u32 %v1142, 4294901760
    %1549 = vmatmul.mubr.f32.gmra.mxu0 %v1548
    %v1550 = vpop.f32.mrf.mxu0
    %v1551 = vadd.f32 %v1468, %v1550
    %v1552 = vpop.f32.mrf.mxu0
    %1553 = vmatprep.mubr.f32.mxu0 0.0
    %v1554 = vand.u32 %v1145, 4294901760
    %1555 = vmatmul.mubr.f32.gmra.mxu0 %v1554
    %v1556 = vpop.f32.mrf.mxu0
    %v1557 = vadd.f32 %v1476, %v1556
    %v1558 = vpop.f32.mrf.mxu0
    %1559 = vdwg.mxu0
    %1560 = vmatprep.subr.mxu0 0.0
    %1561 = vmatpush1.msra.mxu0 0.0
    %1562 = vmatprep.subr.mxu0 0.0
    %1563 = vmatpush1.msra.mxu0 0.0
    %1564 = vmatprep.subr.mxu0 0.0
    %1565 = vmatpush1.msra.mxu0 0.0
    %1566 = vmatprep.subr.mxu0 0.0
    %1567 = vmatpush1.msra.mxu0 0.0
    %1568 = vmatprep.subr.mxu0 0.0
    %1569 = vmatpush1.msra.mxu0 0.0
    %1570 = vmatprep.subr.mxu0 0.0
    %1571 = vmatpush1.msra.mxu0 0.0
    %1572 = vmatprep.subr.mxu0 0.0
    %1573 = vmatpush1.msra.mxu0 0.0
    %1574 = vmatprep.subr.mxu0 0.0
    %1575 = vmatpush1.msra.mxu0 0.0
    %1576 = vmatprep.subr.mxu0 0.0
    %1577 = vmatpush1.msra.mxu0 0.0
    %1578 = vmatprep.subr.mxu0 0.0
    %1579 = vmatpush1.msra.mxu0 0.0
    %1580 = vmatprep.subr.mxu0 0.0
    %1581 = vmatpush1.msra.mxu0 0.0
    %1582 = vmatprep.subr.mxu0 0.0
    %1583 = vmatpush1.msra.mxu0 0.0
    %1584 = vmatprep.subr.mxu0 0.0
    %1585 = vmatpush1.msra.mxu0 0.0
    %1586 = vmatprep.subr.mxu0 0.0
    %1587 = vmatpush1.msra.mxu0 0.0
    %1588 = vmatprep.subr.mxu0 0.0
    %1589 = vmatpush1.msra.mxu0 %v123
    %1590 = vmatprep.subr.mxu0 0.0
    %1591 = vmatpush1.msra.mxu0 %v122
    %1592 = vmatprep.subr.mxu0 0.0
    %1593 = vmatpush2.msra.mxu0 0.0
    %1594 = vmatprep.subr.mxu0 0.0
    %1595 = vmatpush2.msra.mxu0 0.0
    %1596 = vmatprep.subr.mxu0 0.0
    %1597 = vmatpush2.msra.mxu0 0.0
    %1598 = vmatprep.subr.mxu0 0.0
    %1599 = vmatpush2.msra.mxu0 0.0
    %1600 = vmatprep.subr.mxu0 0.0
    %1601 = vmatpush2.msra.mxu0 0.0
    %1602 = vmatprep.subr.mxu0 0.0
    %1603 = vmatpush2.msra.mxu0 0.0
    %1604 = vmatprep.subr.mxu0 0.0
    %1605 = vmatpush2.msra.mxu0 0.0
    %1606 = vmatprep.subr.mxu0 0.0
    %1607 = vmatpush2.msra.mxu0 0.0
    %1608 = vmatprep.subr.mxu0 0.0
    %1609 = vmatpush2.msra.mxu0 0.0
    %1610 = vmatprep.subr.mxu0 0.0
    %1611 = vmatpush2.msra.mxu0 0.0
    %1612 = vmatprep.subr.mxu0 0.0
    %1613 = vmatpush2.msra.mxu0 0.0
    %1614 = vmatprep.subr.mxu0 0.0
    %1615 = vmatpush2.msra.mxu0 0.0
    %1616 = vmatprep.subr.mxu0 0.0
    %1617 = vmatpush2.msra.mxu0 0.0
    %1618 = vmatprep.subr.mxu0 0.0
    %1619 = vmatpush2.msra.mxu0 0.0
    %1620 = vmatprep.subr.mxu0 0.0
    %1621 = vmatpush2.msra.mxu0 0.0
    %1622 = vmatprep.subr.mxu0 0.0
    %1623 = vmatpush2.msra.mxu0 0.0
    %1624 = vmatprep.mubr.f32.mxu0 0.0
    %v1625 = vand.u32 %v1142, 4294901760
    %1626 = vmatmul.mubr.f32.gmra.mxu0 %v1625
    %v1627 = vpop.f32.mrf.mxu0
    %v1628 = vadd.f32 %v1551, %v1627
    %v1629 = vpop.f32.mrf.mxu0
    %1630 = vmatprep.mubr.f32.mxu0 0.0
    %v1631 = vand.u32 %v1145, 4294901760
    %1632 = vmatmul.mubr.f32.gmra.mxu0 %v1631
    %v1633 = vpop.f32.mrf.mxu0
    %v1634 = vadd.f32 %v1557, %v1633
    %v1635 = vpop.f32.mrf.mxu0
    %1636 = vdwg.mxu0
    %1637 = vmatprep.subr.mxu0 0.0
    %1638 = vmatpush1.msra.mxu0 0.0
    %1639 = vmatprep.subr.mxu0 0.0
    %1640 = vmatpush1.msra.mxu0 0.0
    %1641 = vmatprep.subr.mxu0 0.0
    %1642 = vmatpush1.msra.mxu0 0.0
    %1643 = vmatprep.subr.mxu0 0.0
    %1644 = vmatpush1.msra.mxu0 0.0
    %1645 = vmatprep.subr.mxu0 0.0
    %1646 = vmatpush1.msra.mxu0 0.0
    %1647 = vmatprep.subr.mxu0 0.0
    %1648 = vmatpush1.msra.mxu0 0.0
    %1649 = vmatprep.subr.mxu0 0.0
    %1650 = vmatpush1.msra.mxu0 0.0
    %1651 = vmatprep.subr.mxu0 0.0
    %1652 = vmatpush1.msra.mxu0 0.0
    %1653 = vmatprep.subr.mxu0 0.0
    %1654 = vmatpush1.msra.mxu0 0.0
    %1655 = vmatprep.subr.mxu0 0.0
    %1656 = vmatpush1.msra.mxu0 0.0
    %1657 = vmatprep.subr.mxu0 0.0
    %1658 = vmatpush1.msra.mxu0 0.0
    %1659 = vmatprep.subr.mxu0 0.0
    %1660 = vmatpush1.msra.mxu0 0.0
    %1661 = vmatprep.subr.mxu0 0.0
    %1662 = vmatpush1.msra.mxu0 0.0
    %1663 = vmatprep.subr.mxu0 0.0
    %1664 = vmatpush1.msra.mxu0 0.0
    %1665 = vmatprep.subr.mxu0 0.0
    %v1666 = vand.u32 %v102, 4294901760
    %1667 = vmatpush1.msra.mxu0 %v1666
    %1668 = vmatprep.subr.mxu0 0.0
    %v1669 = vand.u32 %v101, 4294901760
    %1670 = vmatpush1.msra.mxu0 %v1669
    %1671 = vmatprep.subr.mxu0 0.0
    %1672 = vmatpush2.msra.mxu0 0.0
    %1673 = vmatprep.subr.mxu0 0.0
    %1674 = vmatpush2.msra.mxu0 0.0
    %1675 = vmatprep.subr.mxu0 0.0
    %1676 = vmatpush2.msra.mxu0 0.0
    %1677 = vmatprep.subr.mxu0 0.0
    %1678 = vmatpush2.msra.mxu0 0.0
    %1679 = vmatprep.subr.mxu0 0.0
    %1680 = vmatpush2.msra.mxu0 0.0
    %1681 = vmatprep.subr.mxu0 0.0
    %1682 = vmatpush2.msra.mxu0 0.0
    %1683 = vmatprep.subr.mxu0 0.0
    %1684 = vmatpush2.msra.mxu0 0.0
    %1685 = vmatprep.subr.mxu0 0.0
    %1686 = vmatpush2.msra.mxu0 0.0
    %1687 = vmatprep.subr.mxu0 0.0
    %1688 = vmatpush2.msra.mxu0 0.0
    %1689 = vmatprep.subr.mxu0 0.0
    %1690 = vmatpush2.msra.mxu0 0.0
    %1691 = vmatprep.subr.mxu0 0.0
    %1692 = vmatpush2.msra.mxu0 0.0
    %1693 = vmatprep.subr.mxu0 0.0
    %1694 = vmatpush2.msra.mxu0 0.0
    %1695 = vmatprep.subr.mxu0 0.0
    %1696 = vmatpush2.msra.mxu0 0.0
    %1697 = vmatprep.subr.mxu0 0.0
    %1698 = vmatpush2.msra.mxu0 0.0
    %1699 = vmatprep.subr.mxu0 0.0
    %1700 = vmatpush2.msra.mxu0 0.0
    %1701 = vmatprep.subr.mxu0 0.0
    %1702 = vmatpush2.msra.mxu0 0.0
    %1703 = vmatprep.mubr.f32.mxu0 0.0
    %v1704 = vand.u32 %v622, 4294901760
    %v1705 = vsub.f32 %v622, %v1704
    %v1706 = vand.u32 %v1705, 4294901760
    %v1707 = vsub.f32 %v1705, %v1706
    %v1708 = vand.u32 %v1707, 4294901760
    %1709 = vmatmul.mubr.f32.gmra.mxu0 %v1708
    %v1710 = vpop.f32.mrf.mxu0
    %v1711 = vadd.f32 %v1628, %v1710
    %v1712 = vpop.f32.mrf.mxu0
    %1713 = vmatprep.mubr.f32.mxu0 0.0
    %v1714 = vand.u32 %v625, 4294901760
    %v1715 = vsub.f32 %v625, %v1714
    %v1716 = vand.u32 %v1715, 4294901760
    %v1717 = vsub.f32 %v1715, %v1716
    %v1718 = vand.u32 %v1717, 4294901760
    %1719 = vmatmul.mubr.f32.gmra.mxu0 %v1718
    %v1720 = vpop.f32.mrf.mxu0
    %v1721 = vadd.f32 %v1634, %v1720
    %v1722 = vpop.f32.mrf.mxu0
    %1723 = vdwg.mxu0
    %1724 = vmatprep.subr.mxu0 0.0
    %1725 = vmatpush1.msra.mxu0 0.0
    %1726 = vmatprep.subr.mxu0 0.0
    %1727 = vmatpush1.msra.mxu0 0.0
    %1728 = vmatprep.subr.mxu0 0.0
    %1729 = vmatpush1.msra.mxu0 0.0
    %1730 = vmatprep.subr.mxu0 0.0
    %1731 = vmatpush1.msra.mxu0 0.0
    %1732 = vmatprep.subr.mxu0 0.0
    %1733 = vmatpush1.msra.mxu0 0.0
    %1734 = vmatprep.subr.mxu0 0.0
    %1735 = vmatpush1.msra.mxu0 0.0
    %1736 = vmatprep.subr.mxu0 0.0
    %1737 = vmatpush1.msra.mxu0 0.0
    %1738 = vmatprep.subr.mxu0 0.0
    %1739 = vmatpush1.msra.mxu0 0.0
    %1740 = vmatprep.subr.mxu0 0.0
    %1741 = vmatpush1.msra.mxu0 0.0
    %1742 = vmatprep.subr.mxu0 0.0
    %1743 = vmatpush1.msra.mxu0 0.0
    %1744 = vmatprep.subr.mxu0 0.0
    %1745 = vmatpush1.msra.mxu0 0.0
    %1746 = vmatprep.subr.mxu0 0.0
    %1747 = vmatpush1.msra.mxu0 0.0
    %1748 = vmatprep.subr.mxu0 0.0
    %1749 = vmatpush1.msra.mxu0 0.0
    %1750 = vmatprep.subr.mxu0 0.0
    %1751 = vmatpush1.msra.mxu0 0.0
    %1752 = vmatprep.subr.mxu0 0.0
    %v1753 = vand.u32 %v102, 4294901760
    %v1754 = vsub.f32 %v102, %v1753
    %v1755 = vand.u32 %v1754, 4294901760
    %v1756 = vsub.f32 %v1754, %v1755
    %v1757 = vand.u32 %v1756, 4294901760
    %1758 = vmatpush1.msra.mxu0 %v1757
    %1759 = vmatprep.subr.mxu0 0.0
    %v1760 = vand.u32 %v101, 4294901760
    %v1761 = vsub.f32 %v101, %v1760
    %v1762 = vand.u32 %v1761, 4294901760
    %v1763 = vsub.f32 %v1761, %v1762
    %v1764 = vand.u32 %v1763, 4294901760
    %1765 = vmatpush1.msra.mxu0 %v1764
    %1766 = vmatprep.subr.mxu0 0.0
    %1767 = vmatpush2.msra.mxu0 0.0
    %1768 = vmatprep.subr.mxu0 0.0
    %1769 = vmatpush2.msra.mxu0 0.0
    %1770 = vmatprep.subr.mxu0 0.0
    %1771 = vmatpush2.msra.mxu0 0.0
    %1772 = vmatprep.subr.mxu0 0.0
    %1773 = vmatpush2.msra.mxu0 0.0
    %1774 = vmatprep.subr.mxu0 0.0
    %1775 = vmatpush2.msra.mxu0 0.0
    %1776 = vmatprep.subr.mxu0 0.0
    %1777 = vmatpush2.msra.mxu0 0.0
    %1778 = vmatprep.subr.mxu0 0.0
    %1779 = vmatpush2.msra.mxu0 0.0
    %1780 = vmatprep.subr.mxu0 0.0
    %1781 = vmatpush2.msra.mxu0 0.0
    %1782 = vmatprep.subr.mxu0 0.0
    %1783 = vmatpush2.msra.mxu0 0.0
    %1784 = vmatprep.subr.mxu0 0.0
    %1785 = vmatpush2.msra.mxu0 0.0
    %1786 = vmatprep.subr.mxu0 0.0
    %1787 = vmatpush2.msra.mxu0 0.0
    %1788 = vmatprep.subr.mxu0 0.0
    %1789 = vmatpush2.msra.mxu0 0.0
    %1790 = vmatprep.subr.mxu0 0.0
    %1791 = vmatpush2.msra.mxu0 0.0
    %1792 = vmatprep.subr.mxu0 0.0
    %1793 = vmatpush2.msra.mxu0 0.0
    %1794 = vmatprep.subr.mxu0 0.0
    %1795 = vmatpush2.msra.mxu0 0.0
    %1796 = vmatprep.subr.mxu0 0.0
    %1797 = vmatpush2.msra.mxu0 0.0
    %1798 = vmatprep.mubr.f32.mxu0 0.0
    %v1799 = vand.u32 %v622, 4294901760
    %1800 = vmatmul.mubr.f32.gmra.mxu0 %v1799
    %v1801 = vpop.f32.mrf.mxu0
    %v1802 = vadd.f32 %v1711, %v1801
    %v1803 = vpop.f32.mrf.mxu0
    %1804 = vmatprep.mubr.f32.mxu0 0.0
    %v1805 = vand.u32 %v625, 4294901760
    %1806 = vmatmul.mubr.f32.gmra.mxu0 %v1805
    %v1807 = vpop.f32.mrf.mxu0
    %v1808 = vadd.f32 %v1721, %v1807
    %v1809 = vpop.f32.mrf.mxu0
    %1810 = vdwg.mxu0
    %1811 = vmatprep.subr.mxu0 0.0
    %1812 = vmatpush1.msra.mxu0 0.0
    %1813 = vmatprep.subr.mxu0 0.0
    %1814 = vmatpush1.msra.mxu0 0.0
    %1815 = vmatprep.subr.mxu0 0.0
    %1816 = vmatpush1.msra.mxu0 0.0
    %1817 = vmatprep.subr.mxu0 0.0
    %1818 = vmatpush1.msra.mxu0 0.0
    %1819 = vmatprep.subr.mxu0 0.0
    %1820 = vmatpush1.msra.mxu0 0.0
    %1821 = vmatprep.subr.mxu0 0.0
    %1822 = vmatpush1.msra.mxu0 0.0
    %1823 = vmatprep.subr.mxu0 0.0
    %1824 = vmatpush1.msra.mxu0 0.0
    %1825 = vmatprep.subr.mxu0 0.0
    %1826 = vmatpush1.msra.mxu0 0.0
    %1827 = vmatprep.subr.mxu0 0.0
    %1828 = vmatpush1.msra.mxu0 0.0
    %1829 = vmatprep.subr.mxu0 0.0
    %1830 = vmatpush1.msra.mxu0 0.0
    %1831 = vmatprep.subr.mxu0 0.0
    %1832 = vmatpush1.msra.mxu0 0.0
    %1833 = vmatprep.subr.mxu0 0.0
    %1834 = vmatpush1.msra.mxu0 0.0
    %1835 = vmatprep.subr.mxu0 0.0
    %1836 = vmatpush1.msra.mxu0 0.0
    %1837 = vmatprep.subr.mxu0 0.0
    %1838 = vmatpush1.msra.mxu0 0.0
    %1839 = vmatprep.subr.mxu0 0.0
    %v1840 = vand.u32 %v102, 4294901760
    %v1841 = vsub.f32 %v102, %v1840
    %1842 = vmatpush1.msra.mxu0 %v1841
    %1843 = vmatprep.subr.mxu0 0.0
    %v1844 = vand.u32 %v101, 4294901760
    %v1845 = vsub.f32 %v101, %v1844
    %1846 = vmatpush1.msra.mxu0 %v1845
    %1847 = vmatprep.subr.mxu0 0.0
    %1848 = vmatpush2.msra.mxu0 0.0
    %1849 = vmatprep.subr.mxu0 0.0
    %1850 = vmatpush2.msra.mxu0 0.0
    %1851 = vmatprep.subr.mxu0 0.0
    %1852 = vmatpush2.msra.mxu0 0.0
    %1853 = vmatprep.subr.mxu0 0.0
    %1854 = vmatpush2.msra.mxu0 0.0
    %1855 = vmatprep.subr.mxu0 0.0
    %1856 = vmatpush2.msra.mxu0 0.0
    %1857 = vmatprep.subr.mxu0 0.0
    %1858 = vmatpush2.msra.mxu0 0.0
    %1859 = vmatprep.subr.mxu0 0.0
    %1860 = vmatpush2.msra.mxu0 0.0
    %1861 = vmatprep.subr.mxu0 0.0
    %1862 = vmatpush2.msra.mxu0 0.0
    %1863 = vmatprep.subr.mxu0 0.0
    %1864 = vmatpush2.msra.mxu0 0.0
    %1865 = vmatprep.subr.mxu0 0.0
    %1866 = vmatpush2.msra.mxu0 0.0
    %1867 = vmatprep.subr.mxu0 0.0
    %1868 = vmatpush2.msra.mxu0 0.0
    %1869 = vmatprep.subr.mxu0 0.0
    %1870 = vmatpush2.msra.mxu0 0.0
    %1871 = vmatprep.subr.mxu0 0.0
    %1872 = vmatpush2.msra.mxu0 0.0
    %1873 = vmatprep.subr.mxu0 0.0
    %1874 = vmatpush2.msra.mxu0 0.0
    %1875 = vmatprep.subr.mxu0 0.0
    %1876 = vmatpush2.msra.mxu0 0.0
    %1877 = vmatprep.subr.mxu0 0.0
    %1878 = vmatpush2.msra.mxu0 0.0
    %1879 = vmatprep.mubr.f32.mxu0 0.0
    %v1880 = vand.u32 %v622, 4294901760
    %v1881 = vsub.f32 %v622, %v1880
    %1882 = vmatmul.mubr.f32.gmra.mxu0 %v1881
    %v1883 = vpop.f32.mrf.mxu0
    %v1884 = vadd.f32 %v1802, %v1883
    %v1885 = vpop.f32.mrf.mxu0
    %1886 = vmatprep.mubr.f32.mxu0 0.0
    %v1887 = vand.u32 %v625, 4294901760
    %v1888 = vsub.f32 %v625, %v1887
    %1889 = vmatmul.mubr.f32.gmra.mxu0 %v1888
    %v1890 = vpop.f32.mrf.mxu0
    %v1891 = vadd.f32 %v1808, %v1890
    %v1892 = vpop.f32.mrf.mxu0
    %1893 = vdwg.mxu0
    %1894 = vmatprep.subr.mxu0 0.0
    %1895 = vmatpush1.msra.mxu0 0.0
    %1896 = vmatprep.subr.mxu0 0.0
    %1897 = vmatpush1.msra.mxu0 0.0
    %1898 = vmatprep.subr.mxu0 0.0
    %1899 = vmatpush1.msra.mxu0 0.0
    %1900 = vmatprep.subr.mxu0 0.0
    %1901 = vmatpush1.msra.mxu0 0.0
    %1902 = vmatprep.subr.mxu0 0.0
    %1903 = vmatpush1.msra.mxu0 0.0
    %1904 = vmatprep.subr.mxu0 0.0
    %1905 = vmatpush1.msra.mxu0 0.0
    %1906 = vmatprep.subr.mxu0 0.0
    %1907 = vmatpush1.msra.mxu0 0.0
    %1908 = vmatprep.subr.mxu0 0.0
    %1909 = vmatpush1.msra.mxu0 0.0
    %1910 = vmatprep.subr.mxu0 0.0
    %1911 = vmatpush1.msra.mxu0 0.0
    %1912 = vmatprep.subr.mxu0 0.0
    %1913 = vmatpush1.msra.mxu0 0.0
    %1914 = vmatprep.subr.mxu0 0.0
    %1915 = vmatpush1.msra.mxu0 0.0
    %1916 = vmatprep.subr.mxu0 0.0
    %1917 = vmatpush1.msra.mxu0 0.0
    %1918 = vmatprep.subr.mxu0 0.0
    %1919 = vmatpush1.msra.mxu0 0.0
    %1920 = vmatprep.subr.mxu0 0.0
    %1921 = vmatpush1.msra.mxu0 0.0
    %1922 = vmatprep.subr.mxu0 0.0
    %v1923 = vand.u32 %v102, 4294901760
    %1924 = vmatpush1.msra.mxu0 %v1923
    %1925 = vmatprep.subr.mxu0 0.0
    %v1926 = vand.u32 %v101, 4294901760
    %1927 = vmatpush1.msra.mxu0 %v1926
    %1928 = vmatprep.subr.mxu0 0.0
    %1929 = vmatpush2.msra.mxu0 0.0
    %1930 = vmatprep.subr.mxu0 0.0
    %1931 = vmatpush2.msra.mxu0 0.0
    %1932 = vmatprep.subr.mxu0 0.0
    %1933 = vmatpush2.msra.mxu0 0.0
    %1934 = vmatprep.subr.mxu0 0.0
    %1935 = vmatpush2.msra.mxu0 0.0
    %1936 = vmatprep.subr.mxu0 0.0
    %1937 = vmatpush2.msra.mxu0 0.0
    %1938 = vmatprep.subr.mxu0 0.0
    %1939 = vmatpush2.msra.mxu0 0.0
    %1940 = vmatprep.subr.mxu0 0.0
    %1941 = vmatpush2.msra.mxu0 0.0
    %1942 = vmatprep.subr.mxu0 0.0
    %1943 = vmatpush2.msra.mxu0 0.0
    %1944 = vmatprep.subr.mxu0 0.0
    %1945 = vmatpush2.msra.mxu0 0.0
    %1946 = vmatprep.subr.mxu0 0.0
    %1947 = vmatpush2.msra.mxu0 0.0
    %1948 = vmatprep.subr.mxu0 0.0
    %1949 = vmatpush2.msra.mxu0 0.0
    %1950 = vmatprep.subr.mxu0 0.0
    %1951 = vmatpush2.msra.mxu0 0.0
    %1952 = vmatprep.subr.mxu0 0.0
    %1953 = vmatpush2.msra.mxu0 0.0
    %1954 = vmatprep.subr.mxu0 0.0
    %1955 = vmatpush2.msra.mxu0 0.0
    %1956 = vmatprep.subr.mxu0 0.0
    %1957 = vmatpush2.msra.mxu0 0.0
    %1958 = vmatprep.subr.mxu0 0.0
    %1959 = vmatpush2.msra.mxu0 0.0
    %1960 = vmatprep.mubr.f32.mxu0 0.0
    %v1961 = vand.u32 %v622, 4294901760
    %v1962 = vsub.f32 %v622, %v1961
    %v1963 = vand.u32 %v1962, 4294901760
    %1964 = vmatmul.mubr.f32.gmra.mxu0 %v1963
    %v1965 = vpop.f32.mrf.mxu0
    %v1966 = vadd.f32 %v1884, %v1965
    %v1967 = vpop.f32.mrf.mxu0
    %1968 = vmatprep.mubr.f32.mxu0 0.0
    %v1969 = vand.u32 %v625, 4294901760
    %v1970 = vsub.f32 %v625, %v1969
    %v1971 = vand.u32 %v1970, 4294901760
    %1972 = vmatmul.mubr.f32.gmra.mxu0 %v1971
    %v1973 = vpop.f32.mrf.mxu0
    %v1974 = vadd.f32 %v1891, %v1973
    %v1975 = vpop.f32.mrf.mxu0
    %1976 = vdwg.mxu0
    %1977 = vmatprep.subr.mxu0 0.0
    %1978 = vmatpush1.msra.mxu0 0.0
    %1979 = vmatprep.subr.mxu0 0.0
    %1980 = vmatpush1.msra.mxu0 0.0
    %1981 = vmatprep.subr.mxu0 0.0
    %1982 = vmatpush1.msra.mxu0 0.0
    %1983 = vmatprep.subr.mxu0 0.0
    %1984 = vmatpush1.msra.mxu0 0.0
    %1985 = vmatprep.subr.mxu0 0.0
    %1986 = vmatpush1.msra.mxu0 0.0
    %1987 = vmatprep.subr.mxu0 0.0
    %1988 = vmatpush1.msra.mxu0 0.0
    %1989 = vmatprep.subr.mxu0 0.0
    %1990 = vmatpush1.msra.mxu0 0.0
    %1991 = vmatprep.subr.mxu0 0.0
    %1992 = vmatpush1.msra.mxu0 0.0
    %1993 = vmatprep.subr.mxu0 0.0
    %1994 = vmatpush1.msra.mxu0 0.0
    %1995 = vmatprep.subr.mxu0 0.0
    %1996 = vmatpush1.msra.mxu0 0.0
    %1997 = vmatprep.subr.mxu0 0.0
    %1998 = vmatpush1.msra.mxu0 0.0
    %1999 = vmatprep.subr.mxu0 0.0
    %2000 = vmatpush1.msra.mxu0 0.0
    %2001 = vmatprep.subr.mxu0 0.0
    %2002 = vmatpush1.msra.mxu0 0.0
    %2003 = vmatprep.subr.mxu0 0.0
    %2004 = vmatpush1.msra.mxu0 0.0
    %2005 = vmatprep.subr.mxu0 0.0
    %v2006 = vand.u32 %v102, 4294901760
    %v2007 = vsub.f32 %v102, %v2006
    %v2008 = vand.u32 %v2007, 4294901760
    %2009 = vmatpush1.msra.mxu0 %v2008
    %2010 = vmatprep.subr.mxu0 0.0
    %v2011 = vand.u32 %v101, 4294901760
    %v2012 = vsub.f32 %v101, %v2011
    %v2013 = vand.u32 %v2012, 4294901760
    %2014 = vmatpush1.msra.mxu0 %v2013
    %2015 = vmatprep.subr.mxu0 0.0
    %2016 = vmatpush2.msra.mxu0 0.0
    %2017 = vmatprep.subr.mxu0 0.0
    %2018 = vmatpush2.msra.mxu0 0.0
    %2019 = vmatprep.subr.mxu0 0.0
    %2020 = vmatpush2.msra.mxu0 0.0
    %2021 = vmatprep.subr.mxu0 0.0
    %2022 = vmatpush2.msra.mxu0 0.0
    %2023 = vmatprep.subr.mxu0 0.0
    %2024 = vmatpush2.msra.mxu0 0.0
    %2025 = vmatprep.subr.mxu0 0.0
    %2026 = vmatpush2.msra.mxu0 0.0
    %2027 = vmatprep.subr.mxu0 0.0
    %2028 = vmatpush2.msra.mxu0 0.0
    %2029 = vmatprep.subr.mxu0 0.0
    %2030 = vmatpush2.msra.mxu0 0.0
    %2031 = vmatprep.subr.mxu0 0.0
    %2032 = vmatpush2.msra.mxu0 0.0
    %2033 = vmatprep.subr.mxu0 0.0
    %2034 = vmatpush2.msra.mxu0 0.0
    %2035 = vmatprep.subr.mxu0 0.0
    %2036 = vmatpush2.msra.mxu0 0.0
    %2037 = vmatprep.subr.mxu0 0.0
    %2038 = vmatpush2.msra.mxu0 0.0
    %2039 = vmatprep.subr.mxu0 0.0
    %2040 = vmatpush2.msra.mxu0 0.0
    %2041 = vmatprep.subr.mxu0 0.0
    %2042 = vmatpush2.msra.mxu0 0.0
    %2043 = vmatprep.subr.mxu0 0.0
    %2044 = vmatpush2.msra.mxu0 0.0
    %2045 = vmatprep.subr.mxu0 0.0
    %2046 = vmatpush2.msra.mxu0 0.0
    %2047 = vmatprep.mubr.f32.mxu0 0.0
    %v2048 = vand.u32 %v622, 4294901760
    %2049 = vmatmul.mubr.f32.gmra.mxu0 %v2048
    %v2050 = vpop.f32.mrf.mxu0
    %v2051 = vadd.f32 %v1966, %v2050
    %v2052 = vpop.f32.mrf.mxu0
    %2053 = vmatprep.mubr.f32.mxu0 0.0
    %v2054 = vand.u32 %v625, 4294901760
    %2055 = vmatmul.mubr.f32.gmra.mxu0 %v2054
    %v2056 = vpop.f32.mrf.mxu0
    %v2057 = vadd.f32 %v1974, %v2056
    %v2058 = vpop.f32.mrf.mxu0
    %2059 = vdwg.mxu0
    %2060 = vmatprep.subr.mxu0 0.0
    %2061 = vmatpush1.msra.mxu0 0.0
    %2062 = vmatprep.subr.mxu0 0.0
    %2063 = vmatpush1.msra.mxu0 0.0
    %2064 = vmatprep.subr.mxu0 0.0
    %2065 = vmatpush1.msra.mxu0 0.0
    %2066 = vmatprep.subr.mxu0 0.0
    %2067 = vmatpush1.msra.mxu0 0.0
    %2068 = vmatprep.subr.mxu0 0.0
    %2069 = vmatpush1.msra.mxu0 0.0
    %2070 = vmatprep.subr.mxu0 0.0
    %2071 = vmatpush1.msra.mxu0 0.0
    %2072 = vmatprep.subr.mxu0 0.0
    %2073 = vmatpush1.msra.mxu0 0.0
    %2074 = vmatprep.subr.mxu0 0.0
    %2075 = vmatpush1.msra.mxu0 0.0
    %2076 = vmatprep.subr.mxu0 0.0
    %2077 = vmatpush1.msra.mxu0 0.0
    %2078 = vmatprep.subr.mxu0 0.0
    %2079 = vmatpush1.msra.mxu0 0.0
    %2080 = vmatprep.subr.mxu0 0.0
    %2081 = vmatpush1.msra.mxu0 0.0
    %2082 = vmatprep.subr.mxu0 0.0
    %2083 = vmatpush1.msra.mxu0 0.0
    %2084 = vmatprep.subr.mxu0 0.0
    %2085 = vmatpush1.msra.mxu0 0.0
    %2086 = vmatprep.subr.mxu0 0.0
    %2087 = vmatpush1.msra.mxu0 0.0
    %2088 = vmatprep.subr.mxu0 0.0
    %v2089 = vand.u32 %v102, 4294901760
    %2090 = vmatpush1.msra.mxu0 %v2089
    %2091 = vmatprep.subr.mxu0 0.0
    %v2092 = vand.u32 %v101, 4294901760
    %2093 = vmatpush1.msra.mxu0 %v2092
    %2094 = vmatprep.subr.mxu0 0.0
    %2095 = vmatpush2.msra.mxu0 0.0
    %2096 = vmatprep.subr.mxu0 0.0
    %2097 = vmatpush2.msra.mxu0 0.0
    %2098 = vmatprep.subr.mxu0 0.0
    %2099 = vmatpush2.msra.mxu0 0.0
    %2100 = vmatprep.subr.mxu0 0.0
    %2101 = vmatpush2.msra.mxu0 0.0
    %2102 = vmatprep.subr.mxu0 0.0
    %2103 = vmatpush2.msra.mxu0 0.0
    %2104 = vmatprep.subr.mxu0 0.0
    %2105 = vmatpush2.msra.mxu0 0.0
    %2106 = vmatprep.subr.mxu0 0.0
    %2107 = vmatpush2.msra.mxu0 0.0
    %2108 = vmatprep.subr.mxu0 0.0
    %2109 = vmatpush2.msra.mxu0 0.0
    %2110 = vmatprep.subr.mxu0 0.0
    %2111 = vmatpush2.msra.mxu0 0.0
    %2112 = vmatprep.subr.mxu0 0.0
    %2113 = vmatpush2.msra.mxu0 0.0
    %2114 = vmatprep.subr.mxu0 0.0
    %2115 = vmatpush2.msra.mxu0 0.0
    %2116 = vmatprep.subr.mxu0 0.0
    %2117 = vmatpush2.msra.mxu0 0.0
    %2118 = vmatprep.subr.mxu0 0.0
    %2119 = vmatpush2.msra.mxu0 0.0
    %2120 = vmatprep.subr.mxu0 0.0
    %2121 = vmatpush2.msra.mxu0 0.0
    %2122 = vmatprep.subr.mxu0 0.0
    %2123 = vmatpush2.msra.mxu0 0.0
    %2124 = vmatprep.subr.mxu0 0.0
    %2125 = vmatpush2.msra.mxu0 0.0
    %2126 = vmatprep.mubr.f32.mxu0 0.0
    %v2127 = vand.u32 %v622, 4294901760
    %2128 = vmatmul.mubr.f32.gmra.mxu0 %v2127
    %v2129 = vpop.f32.mrf.mxu0
    %v2130 = vadd.f32 %v2051, %v2129
    %v2131 = vpop.f32.mrf.mxu0
    %2132 = vmatprep.mubr.f32.mxu0 0.0
    %v2133 = vand.u32 %v625, 4294901760
    %2134 = vmatmul.mubr.f32.gmra.mxu0 %v2133
    %v2135 = vpop.f32.mrf.mxu0
    %v2136 = vadd.f32 %v2057, %v2135
    %v2137 = vpop.f32.mrf.mxu0
    %2138 = vdwg.mxu0
    %v2139 = vand.u32 2147483647, %v2130
    %v2140 = vand.u32 2147483647, %v2136
    %v2141 = vsel %vm124, %v2139, 0.0
    %v2142 = vsel %vm124, %v2140, 0.0
    %v2143 = vadd.f32 %v2141, %v2142
    %v2144 = vrot.slane %v2143, 4
    %v2145 = vadd.f32 %v2143, %v2144
    %v2146 = vrot.slane %v2145, 2
    %v2147 = vadd.f32 %v2145, %v2146
    %v2148 = vrot.slane %v2147, 1
    %v2149 = vadd.f32 %v2147, %v2148
    %v2150 = vadd.f32 %v1140, %v2149
    %vm2151 = vcmask 122880
    %2152 = vst.msk [vmem:[%s2] sm:$0x1] %vm2151, %v2150
    // Predicated region
    $region18: #{laplacian_loss.1} parent=1 // pred_check
      _
    $region19: #{laplacian_loss.1} parent=1 // pred_check_branch
      %2154 = sbr.rel (0) target = $region21
    $region20: #{laplacian_loss.1} parent=1 // pred_region
      _
    $region21: #{laplacian_loss.1} parent=1 // pred_fallthru
      _
    // Predicated region
    $region22: #{laplacian_loss.1} parent=1 // pred_check
      _
    $region23: #{laplacian_loss.1} parent=1 // pred_check_branch
      %2156 = sbr.rel (0) target = $region25
    $region24: #{laplacian_loss.1} parent=1 // pred_region
      _
    $region25: #{laplacian_loss.1} parent=1 // pred_fallthru
      _
    %2157 = vsyncpa [#allocation3], 1
    %2158 = vsyncpa [#allocation5], 1

</llo_original>
